<compile_context>
chip_gen: v7x
topology: tpu7x:2x2x1
jax: 0.10.0
libtpu: 0.0.40
codegen_flags: <defaults>
</compile_context>

<pallas_src>
import functools
import math

import jax
import jax.numpy as jnp
from jax.experimental import pallas as pl
from jax.experimental.pallas import tpu as pltpu


def _mha_kernel(ego_ref, wqf_ref, keys_ref, val_ref, bias_ref, out_ref, *,
                nhead, d_head, scale):
    # ego_ref:  (b, 1, d_model)
    # wqf_ref:  (d_model, nhead*d_head)   fused projection (head slabs on lanes)
    # keys_ref: (nhead, b, Nm1, d_head)
    # val_ref:  (b, Nm1, d_head)
    # bias_ref: (b, 1, Nm1) additive mask bias (0 = keep, -1e30 = masked)
    # out_ref:  (b, 1, d_model)
    ego = ego_ref[...][:, 0, :]                                   # (b, d_model)
    # One fused MXU matmul for all heads' query projections.
    q_all = jnp.dot(ego, wqf_ref[...],
                    preferred_element_type=jnp.float32)           # (b, d_model)
    v = val_ref[...]                                              # (b, Nm1, d_head)
    bias = bias_ref[...]                                          # (b, 1, Nm1)

    outs = []
    for h in range(nhead):                    # static unroll, single grid step
        qh = q_all[:, None, h * d_head:(h + 1) * d_head]          # (b, 1, d_head)
        kh = keys_ref[h]                                          # (b, Nm1, d_head)
        # Scores on the MXU (batched over b).
        s = jnp.einsum('bqd,bkd->bqk', qh, kh,
                       preferred_element_type=jnp.float32)        # (b, 1, Nm1)
        s = s * scale + bias
        # Numerically stable softmax over the key axis (NaN-safe: bias is finite).
        m = jnp.max(s, axis=-1, keepdims=True)
        e = jnp.exp(s - m)
        denom = jnp.sum(e, axis=-1, keepdims=True)
        p = e * pl.reciprocal(denom, approx=True)                 # (b, 1, Nm1)
        # Weighted value sum on the MXU.
        outs.append(jnp.einsum('bqk,bkd->bqd', p, v,
                               preferred_element_type=jnp.float32))  # (b, 1, d_head)

    # Lane-dense output slab (b, 1, d_model) written in one store.
    out_ref[...] = jnp.concatenate(outs, axis=-1).astype(out_ref.dtype)


def multihead_attention(ego, mask, keys, value, W_q):
    nhead, d_model, d_head = W_q.shape
    b = ego.shape[0]
    nm1 = keys.shape[2]
    scale = 1.0 / math.sqrt(d_head)

    # Fused projection weight: column block h*d_head:(h+1)*d_head equals W_q[h].
    wq_flat = jnp.transpose(W_q, (1, 0, 2)).reshape(d_model, nhead * d_head)
    # Additive mask bias with a large finite negative (avoids -inf/NaN hazard).
    bias = jnp.where(mask[:, 1:], 0.0, -1e30).astype(jnp.float32)[:, None, :]

    kernel = functools.partial(_mha_kernel, nhead=nhead, d_head=d_head,
                               scale=scale)
    return pl.pallas_call(
        kernel,
        out_shape=jax.ShapeDtypeStruct((b, 1, d_model), jnp.float32),
        grid=(1,),
        in_specs=[
            pl.BlockSpec((b, 1, d_model), lambda i: (0, 0, 0)),              # ego
            pl.BlockSpec((d_model, nhead * d_head), lambda i: (0, 0)),       # W_q fused
            pl.BlockSpec((nhead, b, nm1, d_head), lambda i: (0, 0, 0, 0)),   # keys
            pl.BlockSpec((b, nm1, d_head), lambda i: (0, 0, 0)),             # value
            pl.BlockSpec((b, 1, nm1), lambda i: (0, 0, 0)),                  # mask bias
        ],
        out_specs=pl.BlockSpec((b, 1, d_model), lambda i: (0, 0, 0)),
        compiler_params=pltpu.CompilerParams(
            dimension_semantics=("arbitrary",)),
    )(ego, wq_flat, keys, value, bias)


def reference_forward(ego, mask, keys, value, W_q):
    """Pure-JAX replica of the PyTorch forward for correctness checking."""
    nhead, d_model, d_head = W_q.shape
    outs = []
    for h in range(nhead):
        q = jnp.einsum('bnd,dh->bnh', ego, W_q[h])            # (b, 1, d_head)
        x = jnp.einsum('bnh,bmh->bnm', q, keys[h])[:, 0]      # (b, N-1)
        x = x / math.sqrt(d_head)
        x = jnp.where(mask[:, 1:], x, -jnp.inf)
        x = jax.nn.softmax(x, axis=-1)[:, None, :]            # (b, 1, N-1)
        outs.append(jnp.einsum('bnm,bmh->bnh', x, value))     # (b, 1, d_head)
    return jnp.concatenate(outs, axis=-1)


if __name__ == "__main__":
    # Small shapes consistent with the module.
    b, N = 2, 9
    d_model, nhead = 32, 4
    d_head = d_model // nhead

    key = jax.random.PRNGKey(0)
    k_wq, k_ego, k_keys, k_val, k_mask = jax.random.split(key, 5)

    # Deterministic parameter init, matching uniform_(-stdv, stdv).
    stdv = 1.0 / math.sqrt(d_model)
    W_q = jax.random.uniform(k_wq, (nhead, d_model, d_head),
                             minval=-stdv, maxval=stdv, dtype=jnp.float32)

    ego = jax.random.normal(k_ego, (b, 1, d_model), dtype=jnp.float32)
    keys = jax.random.normal(k_keys, (nhead, b, N - 1, d_head), dtype=jnp.float32)
    value = jax.random.normal(k_val, (b, N - 1, d_head), dtype=jnp.float32)
    # Random validity mask; keep ego (col 0) and at least one neighbor valid so
    # the torch-semantics reference (which uses -inf) is well defined.
    mask = jax.random.bernoulli(k_mask, 0.7, (b, N))
    mask = mask.at[:, 0].set(True).at[:, 1].set(True)

    out = multihead_attention(ego, mask, keys, value, W_q)
    out = jax.block_until_ready(out)

    ref = reference_forward(ego, mask, keys, value, W_q)
    assert out.shape == (b, 1, d_model)
    # Tolerance loosened slightly (vs 1e-5) because the kernel uses the EUP
    # approximate reciprocal for the softmax normalization.
    assert jnp.allclose(out, ref, atol=5e-3, rtol=5e-3), "mismatch vs reference"

    print("KERNEL_OK")
</pallas_src>

<mosaic_0001>
module attributes {stable_mosaic.version = 11 : i64} {
  func.func @_mha_kernel(%arg0: i32, %arg1: memref<2x1x32xf32, #tpu.memory_space<vmem>>, %arg2: memref<32x32xf32, #tpu.memory_space<vmem>>, %arg3: memref<4x2x8x8xf32, #tpu.memory_space<vmem>>, %arg4: memref<2x8x8xf32, #tpu.memory_space<vmem>>, %arg5: memref<2x1x8xf32, #tpu.memory_space<vmem>>, %arg6: memref<2x1x32xf32, #tpu.memory_space<vmem>>) attributes {dimension_semantics = [#tpu.dimension_semantics<arbitrary>], iteration_bounds = array<i64: 1>, scalar_prefetch = 0 : i64, scratch_operands = 0 : i64, tpu.core_type = #tpu.core_type<tc>, window_params = [{pipeline_mode = #tpu.pipeline_mode<synchronous>, transform_indices = @transform_0, window_bounds = array<i64: 2, 1, 32>}, {pipeline_mode = #tpu.pipeline_mode<synchronous>, transform_indices = @transform_1, window_bounds = array<i64: 32, 32>}, {pipeline_mode = #tpu.pipeline_mode<synchronous>, transform_indices = @transform_2, window_bounds = array<i64: 4, 2, 8, 8>}, {pipeline_mode = #tpu.pipeline_mode<synchronous>, transform_indices = @transform_3, window_bounds = array<i64: 2, 8, 8>}, {pipeline_mode = #tpu.pipeline_mode<synchronous>, transform_indices = @transform_4, window_bounds = array<i64: 2, 1, 8>}, {pipeline_mode = #tpu.pipeline_mode<synchronous>, transform_indices = @transform_5, window_bounds = array<i64: 2, 1, 32>}]} {
    %c0 = arith.constant 0 : index
    %c0_0 = arith.constant 0 : index
    %c0_1 = arith.constant 0 : index
    %0 = vector.load %arg1[%c0, %c0_0, %c0_1] : memref<2x1x32xf32, #tpu.memory_space<vmem>>, vector<2x1x32xf32>
    %1 = vector.shape_cast %0 : vector<2x1x32xf32> to vector<2x32xf32>
    %c0_2 = arith.constant 0 : index
    %c0_3 = arith.constant 0 : index
    %2 = vector.load %arg2[%c0_2, %c0_3] : memref<32x32xf32, #tpu.memory_space<vmem>>, vector<32x32xf32>
    %cst = arith.constant dense<0.000000e+00> : vector<2x32xf32>
    %3 = tpu.matmul %1, %2, %cst {dimension_numbers = #tpu.dot_dimension_numbers<[1], [0], [0], [1], [0, 0, 1, 1], [], []>} : vector<2x32xf32>, vector<32x32xf32>, vector<2x32xf32> -> vector<2x32xf32>
    %c0_4 = arith.constant 0 : index
    %c0_5 = arith.constant 0 : index
    %c0_6 = arith.constant 0 : index
    %4 = vector.load %arg4[%c0_4, %c0_5, %c0_6] : memref<2x8x8xf32, #tpu.memory_space<vmem>>, vector<2x8x8xf32>
    %c0_7 = arith.constant 0 : index
    %c0_8 = arith.constant 0 : index
    %c0_9 = arith.constant 0 : index
    %5 = vector.load %arg5[%c0_7, %c0_8, %c0_9] : memref<2x1x8xf32, #tpu.memory_space<vmem>>, vector<2x1x8xf32>
    %6 = vector.extract_strided_slice %3 {offsets = [0, 0], sizes = [2, 8], strides = [1, 1]} : vector<2x32xf32> to vector<2x8xf32>
    %7 = vector.shape_cast %6 : vector<2x8xf32> to vector<2x1x8xf32>
    %c0_10 = arith.constant 0 : index
    %c0_11 = arith.constant 0 : index
    %c0_12 = arith.constant 0 : index
    %c0_13 = arith.constant 0 : index
    %8 = vector.load %arg3[%c0_10, %c0_11, %c0_12, %c0_13] : memref<4x2x8x8xf32, #tpu.memory_space<vmem>>, vector<1x2x8x8xf32>
    %9 = vector.shape_cast %8 : vector<1x2x8x8xf32> to vector<2x8x8xf32>
    "tpu.trace_start"() <{level = 10 : i32, message = "bqd,bkd->bqk"}> : () -> ()
    %cst_14 = arith.constant dense<0.000000e+00> : vector<2x1x8xf32>
    %10 = tpu.matmul %7, %9, %cst_14 {dimension_numbers = #tpu.dot_dimension_numbers<[2], [2], [1], [1], [0, 0, 0, 1, 1, 1], [0], [0]>} : vector<2x1x8xf32>, vector<2x8x8xf32>, vector<2x1x8xf32> -> vector<2x1x8xf32>
    "tpu.trace_stop"() : () -> ()
    %cst_15 = arith.constant 0.353553385 : f32
    %11 = vector.broadcast %cst_15 : f32 to vector<2x1x8xf32>
    %12 = arith.mulf %10, %11 : vector<2x1x8xf32>
    %13 = arith.addf %12, %5 : vector<2x1x8xf32>
    %cst_16 = arith.constant dense<0xFF800000> : vector<2x1xf32>
    %14 = vector.multi_reduction <maximumf>, %13, %cst_16 [2] : vector<2x1x8xf32> to vector<2x1xf32>
    %15 = vector.shape_cast %14 : vector<2x1xf32> to vector<2x1x1xf32>
    %16 = vector.broadcast %15 : vector<2x1x1xf32> to vector<2x1x8xf32>
    %17 = arith.subf %13, %16 : vector<2x1x8xf32>
    %18 = math.exp %17 : vector<2x1x8xf32>
    %cst_17 = arith.constant dense<0.000000e+00> : vector<2x1xf32>
    %19 = vector.multi_reduction <add>, %18, %cst_17 [2] : vector<2x1x8xf32> to vector<2x1xf32>
    %20 = vector.shape_cast %19 : vector<2x1xf32> to vector<2x1x1xf32>
    %21 = tpu.reciprocal %20 {approx = true} : vector<2x1x1xf32> -> vector<2x1x1xf32>
    %22 = vector.broadcast %21 : vector<2x1x1xf32> to vector<2x1x8xf32>
    %23 = arith.mulf %18, %22 : vector<2x1x8xf32>
    "tpu.trace_start"() <{level = 10 : i32, message = "bqk,bkd->bqd"}> : () -> ()
    %cst_18 = arith.constant dense<0.000000e+00> : vector<2x1x8xf32>
    %24 = tpu.matmul %23, %4, %cst_18 {dimension_numbers = #tpu.dot_dimension_numbers<[2], [1], [1], [2], [0, 0, 0, 1, 1, 2], [0], [0]>} : vector<2x1x8xf32>, vector<2x8x8xf32>, vector<2x1x8xf32> -> vector<2x1x8xf32>
    "tpu.trace_stop"() : () -> ()
    %25 = vector.extract_strided_slice %3 {offsets = [0, 8], sizes = [2, 8], strides = [1, 1]} : vector<2x32xf32> to vector<2x8xf32>
    %26 = vector.shape_cast %25 : vector<2x8xf32> to vector<2x1x8xf32>
    %c1 = arith.constant 1 : index
    %c0_19 = arith.constant 0 : index
    %c0_20 = arith.constant 0 : index
    %c0_21 = arith.constant 0 : index
    %27 = vector.load %arg3[%c1, %c0_19, %c0_20, %c0_21] : memref<4x2x8x8xf32, #tpu.memory_space<vmem>>, vector<1x2x8x8xf32>
    %28 = vector.shape_cast %27 : vector<1x2x8x8xf32> to vector<2x8x8xf32>
    "tpu.trace_start"() <{level = 10 : i32, message = "bqd,bkd->bqk"}> : () -> ()
    %cst_22 = arith.constant dense<0.000000e+00> : vector<2x1x8xf32>
    %29 = tpu.matmul %26, %28, %cst_22 {dimension_numbers = #tpu.dot_dimension_numbers<[2], [2], [1], [1], [0, 0, 0, 1, 1, 1], [0], [0]>} : vector<2x1x8xf32>, vector<2x8x8xf32>, vector<2x1x8xf32> -> vector<2x1x8xf32>
    "tpu.trace_stop"() : () -> ()
    %cst_23 = arith.constant 0.353553385 : f32
    %30 = vector.broadcast %cst_23 : f32 to vector<2x1x8xf32>
    %31 = arith.mulf %29, %30 : vector<2x1x8xf32>
    %32 = arith.addf %31, %5 : vector<2x1x8xf32>
    %cst_24 = arith.constant dense<0xFF800000> : vector<2x1xf32>
    %33 = vector.multi_reduction <maximumf>, %32, %cst_24 [2] : vector<2x1x8xf32> to vector<2x1xf32>
    %34 = vector.shape_cast %33 : vector<2x1xf32> to vector<2x1x1xf32>
    %35 = vector.broadcast %34 : vector<2x1x1xf32> to vector<2x1x8xf32>
    %36 = arith.subf %32, %35 : vector<2x1x8xf32>
    %37 = math.exp %36 : vector<2x1x8xf32>
    %cst_25 = arith.constant dense<0.000000e+00> : vector<2x1xf32>
    %38 = vector.multi_reduction <add>, %37, %cst_25 [2] : vector<2x1x8xf32> to vector<2x1xf32>
    %39 = vector.shape_cast %38 : vector<2x1xf32> to vector<2x1x1xf32>
    %40 = tpu.reciprocal %39 {approx = true} : vector<2x1x1xf32> -> vector<2x1x1xf32>
    %41 = vector.broadcast %40 : vector<2x1x1xf32> to vector<2x1x8xf32>
    %42 = arith.mulf %37, %41 : vector<2x1x8xf32>
    "tpu.trace_start"() <{level = 10 : i32, message = "bqk,bkd->bqd"}> : () -> ()
    %cst_26 = arith.constant dense<0.000000e+00> : vector<2x1x8xf32>
    %43 = tpu.matmul %42, %4, %cst_26 {dimension_numbers = #tpu.dot_dimension_numbers<[2], [1], [1], [2], [0, 0, 0, 1, 1, 2], [0], [0]>} : vector<2x1x8xf32>, vector<2x8x8xf32>, vector<2x1x8xf32> -> vector<2x1x8xf32>
    "tpu.trace_stop"() : () -> ()
    %44 = vector.extract_strided_slice %3 {offsets = [0, 16], sizes = [2, 8], strides = [1, 1]} : vector<2x32xf32> to vector<2x8xf32>
    %45 = vector.shape_cast %44 : vector<2x8xf32> to vector<2x1x8xf32>
    %c2 = arith.constant 2 : index
    %c0_27 = arith.constant 0 : index
    %c0_28 = arith.constant 0 : index
    %c0_29 = arith.constant 0 : index
    %46 = vector.load %arg3[%c2, %c0_27, %c0_28, %c0_29] : memref<4x2x8x8xf32, #tpu.memory_space<vmem>>, vector<1x2x8x8xf32>
    %47 = vector.shape_cast %46 : vector<1x2x8x8xf32> to vector<2x8x8xf32>
    "tpu.trace_start"() <{level = 10 : i32, message = "bqd,bkd->bqk"}> : () -> ()
    %cst_30 = arith.constant dense<0.000000e+00> : vector<2x1x8xf32>
    %48 = tpu.matmul %45, %47, %cst_30 {dimension_numbers = #tpu.dot_dimension_numbers<[2], [2], [1], [1], [0, 0, 0, 1, 1, 1], [0], [0]>} : vector<2x1x8xf32>, vector<2x8x8xf32>, vector<2x1x8xf32> -> vector<2x1x8xf32>
    "tpu.trace_stop"() : () -> ()
    %cst_31 = arith.constant 0.353553385 : f32
    %49 = vector.broadcast %cst_31 : f32 to vector<2x1x8xf32>
    %50 = arith.mulf %48, %49 : vector<2x1x8xf32>
    %51 = arith.addf %50, %5 : vector<2x1x8xf32>
    %cst_32 = arith.constant dense<0xFF800000> : vector<2x1xf32>
    %52 = vector.multi_reduction <maximumf>, %51, %cst_32 [2] : vector<2x1x8xf32> to vector<2x1xf32>
    %53 = vector.shape_cast %52 : vector<2x1xf32> to vector<2x1x1xf32>
    %54 = vector.broadcast %53 : vector<2x1x1xf32> to vector<2x1x8xf32>
    %55 = arith.subf %51, %54 : vector<2x1x8xf32>
    %56 = math.exp %55 : vector<2x1x8xf32>
    %cst_33 = arith.constant dense<0.000000e+00> : vector<2x1xf32>
    %57 = vector.multi_reduction <add>, %56, %cst_33 [2] : vector<2x1x8xf32> to vector<2x1xf32>
    %58 = vector.shape_cast %57 : vector<2x1xf32> to vector<2x1x1xf32>
    %59 = tpu.reciprocal %58 {approx = true} : vector<2x1x1xf32> -> vector<2x1x1xf32>
    %60 = vector.broadcast %59 : vector<2x1x1xf32> to vector<2x1x8xf32>
    %61 = arith.mulf %56, %60 : vector<2x1x8xf32>
    "tpu.trace_start"() <{level = 10 : i32, message = "bqk,bkd->bqd"}> : () -> ()
    %cst_34 = arith.constant dense<0.000000e+00> : vector<2x1x8xf32>
    %62 = tpu.matmul %61, %4, %cst_34 {dimension_numbers = #tpu.dot_dimension_numbers<[2], [1], [1], [2], [0, 0, 0, 1, 1, 2], [0], [0]>} : vector<2x1x8xf32>, vector<2x8x8xf32>, vector<2x1x8xf32> -> vector<2x1x8xf32>
    "tpu.trace_stop"() : () -> ()
    %63 = vector.extract_strided_slice %3 {offsets = [0, 24], sizes = [2, 8], strides = [1, 1]} : vector<2x32xf32> to vector<2x8xf32>
    %64 = vector.shape_cast %63 : vector<2x8xf32> to vector<2x1x8xf32>
    %c3 = arith.constant 3 : index
    %c0_35 = arith.constant 0 : index
    %c0_36 = arith.constant 0 : index
    %c0_37 = arith.constant 0 : index
    %65 = vector.load %arg3[%c3, %c0_35, %c0_36, %c0_37] : memref<4x2x8x8xf32, #tpu.memory_space<vmem>>, vector<1x2x8x8xf32>
    %66 = vector.shape_cast %65 : vector<1x2x8x8xf32> to vector<2x8x8xf32>
    "tpu.trace_start"() <{level = 10 : i32, message = "bqd,bkd->bqk"}> : () -> ()
    %cst_38 = arith.constant dense<0.000000e+00> : vector<2x1x8xf32>
    %67 = tpu.matmul %64, %66, %cst_38 {dimension_numbers = #tpu.dot_dimension_numbers<[2], [2], [1], [1], [0, 0, 0, 1, 1, 1], [0], [0]>} : vector<2x1x8xf32>, vector<2x8x8xf32>, vector<2x1x8xf32> -> vector<2x1x8xf32>
    "tpu.trace_stop"() : () -> ()
    %cst_39 = arith.constant 0.353553385 : f32
    %68 = vector.broadcast %cst_39 : f32 to vector<2x1x8xf32>
    %69 = arith.mulf %67, %68 : vector<2x1x8xf32>
    %70 = arith.addf %69, %5 : vector<2x1x8xf32>
    %cst_40 = arith.constant dense<0xFF800000> : vector<2x1xf32>
    %71 = vector.multi_reduction <maximumf>, %70, %cst_40 [2] : vector<2x1x8xf32> to vector<2x1xf32>
    %72 = vector.shape_cast %71 : vector<2x1xf32> to vector<2x1x1xf32>
    %73 = vector.broadcast %72 : vector<2x1x1xf32> to vector<2x1x8xf32>
    %74 = arith.subf %70, %73 : vector<2x1x8xf32>
    %75 = math.exp %74 : vector<2x1x8xf32>
    %cst_41 = arith.constant dense<0.000000e+00> : vector<2x1xf32>
    %76 = vector.multi_reduction <add>, %75, %cst_41 [2] : vector<2x1x8xf32> to vector<2x1xf32>
    %77 = vector.shape_cast %76 : vector<2x1xf32> to vector<2x1x1xf32>
    %78 = tpu.reciprocal %77 {approx = true} : vector<2x1x1xf32> -> vector<2x1x1xf32>
    %79 = vector.broadcast %78 : vector<2x1x1xf32> to vector<2x1x8xf32>
    %80 = arith.mulf %75, %79 : vector<2x1x8xf32>
    "tpu.trace_start"() <{level = 10 : i32, message = "bqk,bkd->bqd"}> : () -> ()
    %cst_42 = arith.constant dense<0.000000e+00> : vector<2x1x8xf32>
    %81 = tpu.matmul %80, %4, %cst_42 {dimension_numbers = #tpu.dot_dimension_numbers<[2], [1], [1], [2], [0, 0, 0, 1, 1, 2], [0], [0]>} : vector<2x1x8xf32>, vector<2x8x8xf32>, vector<2x1x8xf32> -> vector<2x1x8xf32>
    "tpu.trace_stop"() : () -> ()
    %82 = tpu.concatenate %24, %43, %62, %81 in 2 : vector<2x1x8xf32>, vector<2x1x8xf32>, vector<2x1x8xf32>, vector<2x1x8xf32> -> vector<2x1x32xf32>
    %c0_43 = arith.constant 0 : index
    %c0_44 = arith.constant 0 : index
    %c0_45 = arith.constant 0 : index
    %83 = vector.load %arg6[%c0_43, %c0_44, %c0_45] : memref<2x1x32xf32, #tpu.memory_space<vmem>>, vector<2x1x32xf32>
    tpu.vector_store %arg6[%c0_43, %c0_44, %c0_45], %82 {strides = array<i32>} : memref<2x1x32xf32, #tpu.memory_space<vmem>>, vector<2x1x32xf32>,
    return
  }
  func.func @transform_0(%arg0: i32) -> (i32, i32, i32) {
    %c0_i32 = arith.constant 0 : i32
    %c0_i32_0 = arith.constant 0 : i32
    %c0_i32_1 = arith.constant 0 : i32
    %c0_i32_2 = arith.constant 0 : i32
    return %c0_i32, %c0_i32_0, %c0_i32_1 : i32, i32, i32
  }
  func.func @transform_1(%arg0: i32) -> (i32, i32) {
    %c0_i32 = arith.constant 0 : i32
    %c0_i32_0 = arith.constant 0 : i32
    %c0_i32_1 = arith.constant 0 : i32
    return %c0_i32, %c0_i32_0 : i32, i32
  }
  func.func @transform_2(%arg0: i32) -> (i32, i32, i32, i32) {
    %c0_i32 = arith.constant 0 : i32
    %c0_i32_0 = arith.constant 0 : i32
    %c0_i32_1 = arith.constant 0 : i32
    %c0_i32_2 = arith.constant 0 : i32
    %c0_i32_3 = arith.constant 0 : i32
    return %c0_i32, %c0_i32_0, %c0_i32_1, %c0_i32_2 : i32, i32, i32, i32
  }
  func.func @transform_3(%arg0: i32) -> (i32, i32, i32) {
    %c0_i32 = arith.constant 0 : i32
    %c0_i32_0 = arith.constant 0 : i32
    %c0_i32_1 = arith.constant 0 : i32
    %c0_i32_2 = arith.constant 0 : i32
    return %c0_i32, %c0_i32_0, %c0_i32_1 : i32, i32, i32
  }
  func.func @transform_4(%arg0: i32) -> (i32, i32, i32) {
    %c0_i32 = arith.constant 0 : i32
    %c0_i32_0 = arith.constant 0 : i32
    %c0_i32_1 = arith.constant 0 : i32
    %c0_i32_2 = arith.constant 0 : i32
    return %c0_i32, %c0_i32_0, %c0_i32_1 : i32, i32, i32
  }
  func.func @transform_5(%arg0: i32) -> (i32, i32, i32) {
    %c0_i32 = arith.constant 0 : i32
    %c0_i32_0 = arith.constant 0 : i32
    %c0_i32_1 = arith.constant 0 : i32
    %c0_i32_2 = arith.constant 0 : i32
    return %c0_i32, %c0_i32_0, %c0_i32_1 : i32, i32, i32
  }
}

</mosaic_0001>

<llo_original>
// kernel: tpu_custom_call.1
$region0: #{tpu_custom_call.1}
  #allocation0 [shape = 'u32[]', space=smem, size = 0x4, offset = 0x4, fixed_abs, tag = 'smem constant byte address 0x4 - core index']
  #allocation1 [shape = 'u32[144,128]{1,0:T(1,128)}', space=vmem, size = 0x12000, scoped, tag = 'internal scratch']
  %s0 = inlined_call_operand.hbm [shape: f32[2,1,32], index: 0, kind: input, shape index: {}]
  %s1 = inlined_call_operand.hbm [shape: f32[32,32], index: 1, kind: input, shape index: {}]
  %s2 = inlined_call_operand.hbm [shape: f32[4,2,8,8], index: 2, kind: input, shape index: {}]
  %s3 = inlined_call_operand.hbm [shape: f32[2,8,8], index: 3, kind: input, shape index: {}]
  %s4 = inlined_call_operand.vmem [shape: f32[2,1,8], index: 4, kind: input, shape index: {}]
  %s5 = inlined_call_operand.hbm [shape: f32[2,1,32], index: 5, kind: output, shape index: {}]
  %s6 = sld [smem:[#allocation0]]
  $region46: #{tpu_custom_call.1} parent=0
    _
  %s8 = ssub.s32 1, %s6
  %s9 = scalar_select 0, %s8, %s6
  $region1: #{tpu_custom_call.1} parent=0
    #allocation2 [shape = 'u8[1024]{0}', space=vmem, size = 0x400, scoped, tag = 'input window, operand 0, single buffered']
    #allocation3 [shape = 's32[1]{0}', space=sflag, size = 0x4, scoped, tag = 'scoped memory for tpu_custom_call.1']
    #allocation4 [shape = 's32[1]{0}', space=sflag, size = 0x4, scoped, tag = 'scoped memory for tpu_custom_call.1']
    #allocation5 [shape = 'u8[16384]{0}', space=vmem, size = 0x4000, scoped, tag = 'input window, operand 1, single buffered']
    #allocation6 [shape = 's32[1]{0}', space=sflag, size = 0x4, scoped, tag = 'scoped memory for tpu_custom_call.1']
    #allocation7 [shape = 'u8[32768]{0}', space=vmem, size = 0x8000, scoped, tag = 'input window, operand 2, single buffered']
    #allocation8 [shape = 'u8[8192]{0}', space=vmem, size = 0x2000, scoped, tag = 'input window, operand 3, single buffered']
    #allocation9 [shape = 's32[1]{0}', space=sflag, size = 0x4, scoped, tag = 'scoped memory for tpu_custom_call.1']
    #allocation10 [shape = 'u8[1024]{0}', space=vmem, size = 0x400, scoped, tag = 'output window, operand 0, single buffered']
    %10 = vsyncpa [#allocation3], 0
    %11 = vsyncpa [#allocation6], 0
    %12 = vsyncpa [#allocation9], 0
    %13 = vsyncpa [#allocation4], 0
    // Predicated region
    $region2: #{tpu_custom_call.1} parent=1 // pred_check
      _
    $region3: #{tpu_custom_call.1} parent=1 // pred_check_branch
      %15 = sbr.rel (0) target = $region5
    $region4: #{tpu_custom_call.1} parent=1 // pred_region
      %s17 = ssub.s32 32, 32
      %18 = vsyncadd [#allocation3], %s17
      %s19 = sshll.u32 [#allocation2], 4
      %s20 = int_to_ptr.vmem [resolvable:$true] %s19
      %25 = dma.hbm_to_vmem [thread:$0]  %s0, 32, %s20, [#allocation3], 16, 16, 1
    $region5: #{tpu_custom_call.1} parent=1 // pred_fallthru
      _
    // Predicated region
    $region6: #{tpu_custom_call.1} parent=1 // pred_check
      _
    $region7: #{tpu_custom_call.1} parent=1 // pred_check_branch
      %27 = sbr.rel (0) target = $region9
    $region8: #{tpu_custom_call.1} parent=1 // pred_region
      %s29 = ssub.s32 512, 512
      %30 = vsyncadd [#allocation6], %s29
      %s31 = sshll.u32 [#allocation5], 4
      %s32 = int_to_ptr.vmem [resolvable:$true] %s31
      %37 = dma.hbm_to_vmem [thread:$0]  %s1, 512, %s32, [#allocation6], 128, 128, 8
    $region9: #{tpu_custom_call.1} parent=1 // pred_fallthru
      _
    // Predicated region
    $region10: #{tpu_custom_call.1} parent=1 // pred_check
      _
    $region11: #{tpu_custom_call.1} parent=1 // pred_check_branch
      %39 = sbr.rel (0) target = $region13
    $region12: #{tpu_custom_call.1} parent=1 // pred_region
      %s41 = ssub.s32 1024, 1024
      %42 = vsyncadd [#allocation6], %s41
      %s43 = sshll.u32 [#allocation7], 4
      %s44 = int_to_ptr.vmem [resolvable:$true] %s43
      %49 = dma.hbm_to_vmem [thread:$0]  %s2, 1024, %s44, [#allocation6], 128, 128, 8
    $region13: #{tpu_custom_call.1} parent=1 // pred_fallthru
      _
    // Predicated region
    $region14: #{tpu_custom_call.1} parent=1 // pred_check
      _
    $region15: #{tpu_custom_call.1} parent=1 // pred_check_branch
      %51 = sbr.rel (0) target = $region17
    $region16: #{tpu_custom_call.1} parent=1 // pred_region
      %s53 = ssub.s32 256, 256
      %54 = vsyncadd [#allocation9], %s53
      %s55 = sshll.u32 [#allocation8], 4
      %s56 = int_to_ptr.vmem [resolvable:$true] %s55
      %61 = dma.hbm_to_vmem [thread:$0]  %s3, 256, %s56, [#allocation9], 128, 128, 8
    $region17: #{tpu_custom_call.1} parent=1 // pred_fallthru
      _
    // Predicated region
    $region18: #{tpu_custom_call.1} parent=1 // pred_check
      _
    $region19: #{tpu_custom_call.1} parent=1 // pred_check_branch
      %63 = sbr.rel (0) target = $region21
    $region20: #{tpu_custom_call.1} parent=1 // pred_region
      _
    $region21: #{tpu_custom_call.1} parent=1 // pred_fallthru
      _
    // Predicated region
    $region22: #{tpu_custom_call.1} parent=1 // pred_check
      _
    $region23: #{tpu_custom_call.1} parent=1 // pred_check_branch
      %65 = sbr.rel (0) target = $region25
    $region24: #{tpu_custom_call.1} parent=1 // pred_region
      %66 = dma.done [#allocation3], 32
    $region25: #{tpu_custom_call.1} parent=1 // pred_fallthru
      _
    // Predicated region
    $region26: #{tpu_custom_call.1} parent=1 // pred_check
      _
    $region27: #{tpu_custom_call.1} parent=1 // pred_check_branch
      %68 = sbr.rel (0) target = $region29
    $region28: #{tpu_custom_call.1} parent=1 // pred_region
      %69 = dma.done [#allocation6], 512
    $region29: #{tpu_custom_call.1} parent=1 // pred_fallthru
      _
    // Predicated region
    $region30: #{tpu_custom_call.1} parent=1 // pred_check
      _
    $region31: #{tpu_custom_call.1} parent=1 // pred_check_branch
      %71 = sbr.rel (0) target = $region33
    $region32: #{tpu_custom_call.1} parent=1 // pred_region
      %72 = dma.done [#allocation6], 1024
    $region33: #{tpu_custom_call.1} parent=1 // pred_fallthru
      _
    // Predicated region
    $region34: #{tpu_custom_call.1} parent=1 // pred_check
      _
    $region35: #{tpu_custom_call.1} parent=1 // pred_check_branch
      %74 = sbr.rel (0) target = $region37
    $region36: #{tpu_custom_call.1} parent=1 // pred_region
      %75 = dma.done [#allocation9], 256
    $region37: #{tpu_custom_call.1} parent=1 // pred_fallthru
      _
    %v76 = vld [vmem:[#allocation2] sm:$0x1]
    %v77 = vld [vmem:[#allocation2 + $0x1] sm:$0x1]
    %v78 = vld [vmem:[#allocation5] sm:$0xff]
    %v79 = vld [vmem:[#allocation5 + $0x8] sm:$0xff]
    %v80 = vld [vmem:[#allocation5 + $0x10] sm:$0xff]
    %v81 = vld [vmem:[#allocation5 + $0x18] sm:$0xff]
    %v84 = vcombine.low %v76, %v77
    %v86 = vunpack.c.l.s4 1966171168
    %v87 = vunpack.c.0.s8 %v86
    %v88 = vlaneseq
    %v89 = vshrl.u32 %v88, 7
    %v90 = vsub.s32 %v87, %v89
    %v91 = vrot.slane %v84, %v90
    %v93 = vunpack.c.l.s4 1966171168
    %v94 = vunpack.c.0.s8 %v93
    %v95 = vlaneseq
    %v96 = vshrl.u32 %v95, 7
    %v97 = vsub.s32 %v94, %v96
    %v98 = vrot.slane %v91, %v97
    %vm99 = vcmask 261120
    %v100 = vsel %vm99, %v98, 0
    %102 = vmatprep.subr.mxu0 0.0
    %103 = vmatpush1.msra.mxu0 %v78
    %104 = vmatprep.subr.mxu0 0.0
    %105 = vmatpush1.msra.mxu0 %v79
    %106 = vmatprep.subr.mxu0 0.0
    %107 = vmatpush1.msra.mxu0 %v80
    %108 = vmatprep.subr.mxu0 0.0
    %109 = vmatpush1.msra.mxu0 %v81
    %110 = vmatprep.subr.mxu0 0.0
    %111 = vmatpush1.msra.mxu0 0.0
    %112 = vmatprep.subr.mxu0 0.0
    %113 = vmatpush1.msra.mxu0 0.0
    %114 = vmatprep.subr.mxu0 0.0
    %115 = vmatpush1.msra.mxu0 0.0
    %116 = vmatprep.subr.mxu0 0.0
    %117 = vmatpush1.msra.mxu0 0.0
    %118 = vmatprep.subr.mxu0 0.0
    %119 = vmatpush1.msra.mxu0 0.0
    %120 = vmatprep.subr.mxu0 0.0
    %121 = vmatpush1.msra.mxu0 0.0
    %122 = vmatprep.subr.mxu0 0.0
    %123 = vmatpush1.msra.mxu0 0.0
    %124 = vmatprep.subr.mxu0 0.0
    %125 = vmatpush1.msra.mxu0 0.0
    %126 = vmatprep.subr.mxu0 0.0
    %127 = vmatpush1.msra.mxu0 0.0
    %128 = vmatprep.subr.mxu0 0.0
    %129 = vmatpush1.msra.mxu0 0.0
    %130 = vmatprep.subr.mxu0 0.0
    %131 = vmatpush1.msra.mxu0 0.0
    %132 = vmatprep.subr.mxu0 0.0
    %133 = vmatpush1.msra.mxu0 0.0
    %134 = vmatprep.subr.mxu0 0.0
    %135 = vmatpush1.msra.mxu0 0.0
    %136 = vmatprep.subr.mxu0 0.0
    %137 = vmatpush1.msra.mxu0 0.0
    %138 = vmatprep.subr.mxu0 0.0
    %139 = vmatpush1.msra.mxu0 0.0
    %140 = vmatprep.subr.mxu0 0.0
    %141 = vmatpush1.msra.mxu0 0.0
    %142 = vmatprep.subr.mxu0 0.0
    %143 = vmatpush1.msra.mxu0 0.0
    %144 = vmatprep.subr.mxu0 0.0
    %145 = vmatpush1.msra.mxu0 0.0
    %146 = vmatprep.subr.mxu0 0.0
    %147 = vmatpush1.msra.mxu0 0.0
    %148 = vmatprep.subr.mxu0 0.0
    %149 = vmatpush1.msra.mxu0 0.0
    %150 = vmatprep.subr.mxu0 0.0
    %151 = vmatpush1.msra.mxu0 0.0
    %152 = vmatprep.subr.mxu0 0.0
    %153 = vmatpush1.msra.mxu0 0.0
    %154 = vmatprep.subr.mxu0 0.0
    %155 = vmatpush1.msra.mxu0 0.0
    %156 = vmatprep.subr.mxu0 0.0
    %157 = vmatpush1.msra.mxu0 0.0
    %158 = vmatprep.subr.mxu0 0.0
    %159 = vmatpush1.msra.mxu0 0.0
    %160 = vmatprep.subr.mxu0 0.0
    %161 = vmatpush1.msra.mxu0 0.0
    %162 = vmatprep.subr.mxu0 0.0
    %163 = vmatpush1.msra.mxu0 0.0
    %164 = vmatprep.subr.mxu0 0.0
    %165 = vmatpush1.msra.mxu0 0.0
    %166 = vmatprep.mubr.f32.mxu0 0.0
    %167 = vmatmul.mubr.f32.gmra.mrb[0].mxu0 %v100
    %v168 = vpop.f32.mrb[0].mxu0
    %v169 = vadd.f32 0.0, %v168
    %v170 = vpop.f32.mrb[0].mxu0
    %171 = vdwg.mxu0
    %v172 = vld [vmem:[#allocation8] sm:$0xff]
    %v173 = vld [vmem:[#allocation8 + $0x8] sm:$0xff]
    %v174 = vld [vmem:[%s4] sm:$0x1]
    %v175 = vld [vmem:[%s4 + $0x1] sm:$0x1]
    %v178 = vunpack.c.l.s4 1966171168
    %v179 = vunpack.c.0.s8 %v178
    %v180 = vlaneseq
    %v181 = vshrl.u32 %v180, 7
    %v182 = vsub.s32 %v179, %v181
    %v183 = vrot.slane %v169, %v182
    %v184 = vcombine.high %v183, %v183
    %v186 = vunpack.c.l.s4 1966171168
    %v187 = vunpack.c.0.s8 %v186
    %v188 = vlaneseq
    %v189 = vshrl.u32 %v188, 7
    %v190 = vsub.s32 %v187, %v189
    %v191 = vrot.slane %v183, %v190
    %v193 = vunpack.c.l.s4 1966171168
    %v194 = vunpack.c.0.s8 %v193
    %v195 = vlaneseq
    %v196 = vshrl.u32 %v195, 7
    %v197 = vsub.s32 %v194, %v196
    %v198 = vrot.slane %v184, %v197
    %v199 = vld [vmem:[#allocation7] sm:$0xff]
    %v200 = vld [vmem:[#allocation7 + $0x8] sm:$0xff]
    %vm201 = vcmask 64512
    %v202 = vsel %vm201, %v191, 0
    %v205 = vsel %vm201, %v199, 0
    %207 = vmatprep.subr.mxu0 0.0
    %208 = vmatpush1.xpose.msra.mxu0 %v205
    %209 = vmatprep.subr.mxu0 0.0
    %210 = vmatpush1.xpose.msra.mxu0 0.0
    %211 = vmatprep.subr.mxu0 0.0
    %212 = vmatpush1.xpose.msra.mxu0 0.0
    %213 = vmatprep.subr.mxu0 0.0
    %214 = vmatpush1.xpose.msra.mxu0 0.0
    %215 = vmatprep.subr.mxu0 0.0
    %216 = vmatpush1.xpose.msra.mxu0 0.0
    %217 = vmatprep.subr.mxu0 0.0
    %218 = vmatpush1.xpose.msra.mxu0 0.0
    %219 = vmatprep.subr.mxu0 0.0
    %220 = vmatpush1.xpose.msra.mxu0 0.0
    %221 = vmatprep.subr.mxu0 0.0
    %222 = vmatpush1.xpose.msra.mxu0 0.0
    %223 = vmatprep.subr.mxu0 0.0
    %224 = vmatpush1.xpose.msra.mxu0 0.0
    %225 = vmatprep.subr.mxu0 0.0
    %226 = vmatpush1.xpose.msra.mxu0 0.0
    %227 = vmatprep.subr.mxu0 0.0
    %228 = vmatpush1.xpose.msra.mxu0 0.0
    %229 = vmatprep.subr.mxu0 0.0
    %230 = vmatpush1.xpose.msra.mxu0 0.0
    %231 = vmatprep.subr.mxu0 0.0
    %232 = vmatpush1.xpose.msra.mxu0 0.0
    %233 = vmatprep.subr.mxu0 0.0
    %234 = vmatpush1.xpose.msra.mxu0 0.0
    %235 = vmatprep.subr.mxu0 0.0
    %236 = vmatpush1.xpose.msra.mxu0 0.0
    %237 = vmatprep.subr.mxu0 0.0
    %238 = vmatpush1.xpose.msra.mxu0 0.0
    %239 = vmatprep.subr.mxu0 0.0
    %240 = vmatpush1.xpose.msra.mxu0 0.0
    %241 = vmatprep.subr.mxu0 0.0
    %242 = vmatpush1.xpose.msra.mxu0 0.0
    %243 = vmatprep.subr.mxu0 0.0
    %244 = vmatpush1.xpose.msra.mxu0 0.0
    %245 = vmatprep.subr.mxu0 0.0
    %246 = vmatpush1.xpose.msra.mxu0 0.0
    %247 = vmatprep.subr.mxu0 0.0
    %248 = vmatpush1.xpose.msra.mxu0 0.0
    %249 = vmatprep.subr.mxu0 0.0
    %250 = vmatpush1.xpose.msra.mxu0 0.0
    %251 = vmatprep.subr.mxu0 0.0
    %252 = vmatpush1.xpose.msra.mxu0 0.0
    %253 = vmatprep.subr.mxu0 0.0
    %254 = vmatpush1.xpose.msra.mxu0 0.0
    %255 = vmatprep.subr.mxu0 0.0
    %256 = vmatpush1.xpose.msra.mxu0 0.0
    %257 = vmatprep.subr.mxu0 0.0
    %258 = vmatpush1.xpose.msra.mxu0 0.0
    %259 = vmatprep.subr.mxu0 0.0
    %260 = vmatpush1.xpose.msra.mxu0 0.0
    %261 = vmatprep.subr.mxu0 0.0
    %262 = vmatpush1.xpose.msra.mxu0 0.0
    %263 = vmatprep.subr.mxu0 0.0
    %264 = vmatpush1.xpose.msra.mxu0 0.0
    %265 = vmatprep.subr.mxu0 0.0
    %266 = vmatpush1.xpose.msra.mxu0 0.0
    %267 = vmatprep.subr.mxu0 0.0
    %268 = vmatpush1.xpose.msra.mxu0 0.0
    %269 = vmatprep.subr.mxu0 0.0
    %270 = vmatpush1.xpose.msra.mxu0 0.0
    %271 = vmatprep.mubr.f32.mxu0 0.0
    %272 = vmatmul.mubr.f32.gmra.mrb[0].mxu0 %v202
    %v273 = vpop.f32.mrb[0].mxu0
    %v274 = vadd.f32 0.0, %v273
    %v275 = vpop.f32.mrb[0].mxu0
    %276 = vdwg.mxu0
    %v277 = vsel %vm201, %v198, 0
    %v280 = vsel %vm201, %v200, 0
    %282 = vmatprep.subr.mxu0 0.0
    %283 = vmatpush1.xpose.msra.mxu0 %v280
    %284 = vmatprep.subr.mxu0 0.0
    %285 = vmatpush1.xpose.msra.mxu0 0.0
    %286 = vmatprep.subr.mxu0 0.0
    %287 = vmatpush1.xpose.msra.mxu0 0.0
    %288 = vmatprep.subr.mxu0 0.0
    %289 = vmatpush1.xpose.msra.mxu0 0.0
    %290 = vmatprep.subr.mxu0 0.0
    %291 = vmatpush1.xpose.msra.mxu0 0.0
    %292 = vmatprep.subr.mxu0 0.0
    %293 = vmatpush1.xpose.msra.mxu0 0.0
    %294 = vmatprep.subr.mxu0 0.0
    %295 = vmatpush1.xpose.msra.mxu0 0.0
    %296 = vmatprep.subr.mxu0 0.0
    %297 = vmatpush1.xpose.msra.mxu0 0.0
    %298 = vmatprep.subr.mxu0 0.0
    %299 = vmatpush1.xpose.msra.mxu0 0.0
    %300 = vmatprep.subr.mxu0 0.0
    %301 = vmatpush1.xpose.msra.mxu0 0.0
    %302 = vmatprep.subr.mxu0 0.0
    %303 = vmatpush1.xpose.msra.mxu0 0.0
    %304 = vmatprep.subr.mxu0 0.0
    %305 = vmatpush1.xpose.msra.mxu0 0.0
    %306 = vmatprep.subr.mxu0 0.0
    %307 = vmatpush1.xpose.msra.mxu0 0.0
    %308 = vmatprep.subr.mxu0 0.0
    %309 = vmatpush1.xpose.msra.mxu0 0.0
    %310 = vmatprep.subr.mxu0 0.0
    %311 = vmatpush1.xpose.msra.mxu0 0.0
    %312 = vmatprep.subr.mxu0 0.0
    %313 = vmatpush1.xpose.msra.mxu0 0.0
    %314 = vmatprep.subr.mxu0 0.0
    %315 = vmatpush1.xpose.msra.mxu0 0.0
    %316 = vmatprep.subr.mxu0 0.0
    %317 = vmatpush1.xpose.msra.mxu0 0.0
    %318 = vmatprep.subr.mxu0 0.0
    %319 = vmatpush1.xpose.msra.mxu0 0.0
    %320 = vmatprep.subr.mxu0 0.0
    %321 = vmatpush1.xpose.msra.mxu0 0.0
    %322 = vmatprep.subr.mxu0 0.0
    %323 = vmatpush1.xpose.msra.mxu0 0.0
    %324 = vmatprep.subr.mxu0 0.0
    %325 = vmatpush1.xpose.msra.mxu0 0.0
    %326 = vmatprep.subr.mxu0 0.0
    %327 = vmatpush1.xpose.msra.mxu0 0.0
    %328 = vmatprep.subr.mxu0 0.0
    %329 = vmatpush1.xpose.msra.mxu0 0.0
    %330 = vmatprep.subr.mxu0 0.0
    %331 = vmatpush1.xpose.msra.mxu0 0.0
    %332 = vmatprep.subr.mxu0 0.0
    %333 = vmatpush1.xpose.msra.mxu0 0.0
    %334 = vmatprep.subr.mxu0 0.0
    %335 = vmatpush1.xpose.msra.mxu0 0.0
    %336 = vmatprep.subr.mxu0 0.0
    %337 = vmatpush1.xpose.msra.mxu0 0.0
    %338 = vmatprep.subr.mxu0 0.0
    %339 = vmatpush1.xpose.msra.mxu0 0.0
    %340 = vmatprep.subr.mxu0 0.0
    %341 = vmatpush1.xpose.msra.mxu0 0.0
    %342 = vmatprep.subr.mxu0 0.0
    %343 = vmatpush1.xpose.msra.mxu0 0.0
    %344 = vmatprep.subr.mxu0 0.0
    %345 = vmatpush1.xpose.msra.mxu0 0.0
    %346 = vmatprep.mubr.f32.mxu0 0.0
    %347 = vmatmul.mubr.f32.gmra.mrb[0].mxu0 %v277
    %v348 = vpop.f32.mrb[0].mxu0
    %v349 = vadd.f32 0.0, %v348
    %v350 = vpop.f32.mrb[0].mxu0
    %351 = vdwg.mxu0
    %v352 = vmul.f32 %v274, 0.35355338
    %v353 = vmul.f32 %v349, 0.35355338
    %v354 = vadd.f32 %v352, %v174
    %v355 = vadd.f32 %v353, %v175
    %vm356 = vcmask 57344
    %v357 = vsel %vm356, %v354, -inf
    %358 = vmax.xlane.f32.xlu0 %v357
    %v359 = vpop.xlane.xlu0 %358
    %v360 = vsel %vm356, %v355, -inf
    %361 = vmax.xlane.f32.xlu0 %v360
    %v362 = vpop.xlane.xlu0 %361
    %v363 = vsub.f32 %v354, %v359
    %v364 = vsub.f32 %v355, %v362
    %v365 = vmul.f32 %v363, 1.442695
    %v366 = vpow.pop %v365
    %v367 = vmul.f32 %v364, 1.442695
    %v368 = vpow.pop %v367
    %v369 = vsel %vm356, %v366, 0.0
    %370 = vadd.xlane.f32.xlu0 %v369
    %v371 = vpop.xlane.xlu0 %370
    %v372 = vsel %vm356, %v368, 0.0
    %373 = vadd.xlane.f32.xlu0 %v372
    %v374 = vpop.xlane.xlu0 %373
    %v375 = vrcp.pop %v371
    %v376 = vrcp.pop %v374
    %v377 = vmul.f32 %v366, %v375
    %v378 = vmul.f32 %v368, %v376
    %v380 = vsel %vm201, %v377, 0
    %382 = vmatprep.subr.mxu0 0.0
    %383 = vmatpush1.msra.mxu0 %v172
    %384 = vmatprep.subr.mxu0 0.0
    %385 = vmatpush1.msra.mxu0 0.0
    %386 = vmatprep.subr.mxu0 0.0
    %387 = vmatpush1.msra.mxu0 0.0
    %388 = vmatprep.subr.mxu0 0.0
    %389 = vmatpush1.msra.mxu0 0.0
    %390 = vmatprep.subr.mxu0 0.0
    %391 = vmatpush1.msra.mxu0 0.0
    %392 = vmatprep.subr.mxu0 0.0
    %393 = vmatpush1.msra.mxu0 0.0
    %394 = vmatprep.subr.mxu0 0.0
    %395 = vmatpush1.msra.mxu0 0.0
    %396 = vmatprep.subr.mxu0 0.0
    %397 = vmatpush1.msra.mxu0 0.0
    %398 = vmatprep.subr.mxu0 0.0
    %399 = vmatpush1.msra.mxu0 0.0
    %400 = vmatprep.subr.mxu0 0.0
    %401 = vmatpush1.msra.mxu0 0.0
    %402 = vmatprep.subr.mxu0 0.0
    %403 = vmatpush1.msra.mxu0 0.0
    %404 = vmatprep.subr.mxu0 0.0
    %405 = vmatpush1.msra.mxu0 0.0
    %406 = vmatprep.subr.mxu0 0.0
    %407 = vmatpush1.msra.mxu0 0.0
    %408 = vmatprep.subr.mxu0 0.0
    %409 = vmatpush1.msra.mxu0 0.0
    %410 = vmatprep.subr.mxu0 0.0
    %411 = vmatpush1.msra.mxu0 0.0
    %412 = vmatprep.subr.mxu0 0.0
    %413 = vmatpush1.msra.mxu0 0.0
    %414 = vmatprep.subr.mxu0 0.0
    %415 = vmatpush1.msra.mxu0 0.0
    %416 = vmatprep.subr.mxu0 0.0
    %417 = vmatpush1.msra.mxu0 0.0
    %418 = vmatprep.subr.mxu0 0.0
    %419 = vmatpush1.msra.mxu0 0.0
    %420 = vmatprep.subr.mxu0 0.0
    %421 = vmatpush1.msra.mxu0 0.0
    %422 = vmatprep.subr.mxu0 0.0
    %423 = vmatpush1.msra.mxu0 0.0
    %424 = vmatprep.subr.mxu0 0.0
    %425 = vmatpush1.msra.mxu0 0.0
    %426 = vmatprep.subr.mxu0 0.0
    %427 = vmatpush1.msra.mxu0 0.0
    %428 = vmatprep.subr.mxu0 0.0
    %429 = vmatpush1.msra.mxu0 0.0
    %430 = vmatprep.subr.mxu0 0.0
    %431 = vmatpush1.msra.mxu0 0.0
    %432 = vmatprep.subr.mxu0 0.0
    %433 = vmatpush1.msra.mxu0 0.0
    %434 = vmatprep.subr.mxu0 0.0
    %435 = vmatpush1.msra.mxu0 0.0
    %436 = vmatprep.subr.mxu0 0.0
    %437 = vmatpush1.msra.mxu0 0.0
    %438 = vmatprep.subr.mxu0 0.0
    %439 = vmatpush1.msra.mxu0 0.0
    %440 = vmatprep.subr.mxu0 0.0
    %441 = vmatpush1.msra.mxu0 0.0
    %442 = vmatprep.subr.mxu0 0.0
    %443 = vmatpush1.msra.mxu0 0.0
    %444 = vmatprep.subr.mxu0 0.0
    %445 = vmatpush1.msra.mxu0 0.0
    %446 = vmatprep.mubr.f32.mxu0 0.0
    %447 = vmatmul.mubr.f32.gmra.mrb[0].mxu0 %v380
    %v448 = vpop.f32.mrb[0].mxu0
    %v449 = vadd.f32 0.0, %v448
    %v450 = vpop.f32.mrb[0].mxu0
    %451 = vdwg.mxu0
    %v453 = vsel %vm201, %v378, 0
    %455 = vmatprep.subr.mxu0 0.0
    %456 = vmatpush1.msra.mxu0 %v173
    %457 = vmatprep.subr.mxu0 0.0
    %458 = vmatpush1.msra.mxu0 0.0
    %459 = vmatprep.subr.mxu0 0.0
    %460 = vmatpush1.msra.mxu0 0.0
    %461 = vmatprep.subr.mxu0 0.0
    %462 = vmatpush1.msra.mxu0 0.0
    %463 = vmatprep.subr.mxu0 0.0
    %464 = vmatpush1.msra.mxu0 0.0
    %465 = vmatprep.subr.mxu0 0.0
    %466 = vmatpush1.msra.mxu0 0.0
    %467 = vmatprep.subr.mxu0 0.0
    %468 = vmatpush1.msra.mxu0 0.0
    %469 = vmatprep.subr.mxu0 0.0
    %470 = vmatpush1.msra.mxu0 0.0
    %471 = vmatprep.subr.mxu0 0.0
    %472 = vmatpush1.msra.mxu0 0.0
    %473 = vmatprep.subr.mxu0 0.0
    %474 = vmatpush1.msra.mxu0 0.0
    %475 = vmatprep.subr.mxu0 0.0
    %476 = vmatpush1.msra.mxu0 0.0
    %477 = vmatprep.subr.mxu0 0.0
    %478 = vmatpush1.msra.mxu0 0.0
    %479 = vmatprep.subr.mxu0 0.0
    %480 = vmatpush1.msra.mxu0 0.0
    %481 = vmatprep.subr.mxu0 0.0
    %482 = vmatpush1.msra.mxu0 0.0
    %483 = vmatprep.subr.mxu0 0.0
    %484 = vmatpush1.msra.mxu0 0.0
    %485 = vmatprep.subr.mxu0 0.0
    %486 = vmatpush1.msra.mxu0 0.0
    %487 = vmatprep.subr.mxu0 0.0
    %488 = vmatpush1.msra.mxu0 0.0
    %489 = vmatprep.subr.mxu0 0.0
    %490 = vmatpush1.msra.mxu0 0.0
    %491 = vmatprep.subr.mxu0 0.0
    %492 = vmatpush1.msra.mxu0 0.0
    %493 = vmatprep.subr.mxu0 0.0
    %494 = vmatpush1.msra.mxu0 0.0
    %495 = vmatprep.subr.mxu0 0.0
    %496 = vmatpush1.msra.mxu0 0.0
    %497 = vmatprep.subr.mxu0 0.0
    %498 = vmatpush1.msra.mxu0 0.0
    %499 = vmatprep.subr.mxu0 0.0
    %500 = vmatpush1.msra.mxu0 0.0
    %501 = vmatprep.subr.mxu0 0.0
    %502 = vmatpush1.msra.mxu0 0.0
    %503 = vmatprep.subr.mxu0 0.0
    %504 = vmatpush1.msra.mxu0 0.0
    %505 = vmatprep.subr.mxu0 0.0
    %506 = vmatpush1.msra.mxu0 0.0
    %507 = vmatprep.subr.mxu0 0.0
    %508 = vmatpush1.msra.mxu0 0.0
    %509 = vmatprep.subr.mxu0 0.0
    %510 = vmatpush1.msra.mxu0 0.0
    %511 = vmatprep.subr.mxu0 0.0
    %512 = vmatpush1.msra.mxu0 0.0
    %513 = vmatprep.subr.mxu0 0.0
    %514 = vmatpush1.msra.mxu0 0.0
    %515 = vmatprep.subr.mxu0 0.0
    %516 = vmatpush1.msra.mxu0 0.0
    %517 = vmatprep.subr.mxu0 0.0
    %518 = vmatpush1.msra.mxu0 0.0
    %519 = vmatprep.mubr.f32.mxu0 0.0
    %520 = vmatmul.mubr.f32.gmra.mrb[0].mxu0 %v453
    %v521 = vpop.f32.mrb[0].mxu0
    %v522 = vadd.f32 0.0, %v521
    %v523 = vpop.f32.mrb[0].mxu0
    %524 = vdwg.mxu0
    %s525 = scalar_lea.vmem [#allocation7], 16
    %v526 = vld [vmem:[%s525] sm:$0xff]
    %v527 = vld [vmem:[%s525 + $0x8] sm:$0xff]
    %v528 = vlaneseq
    %v529 = vshrl.u32 %v528, 7
    %v530 = vsub.s32 0, %v529
    %v531 = vrot.slane %v191, %v530
    %532 = vrot.lane.b32.xlu0 %v531, 120
    %v533 = vpop.permute.xlu0 %532
    %v534 = vsel %vm201, %v533, 0
    %v537 = vsel %vm201, %v526, 0
    %539 = vmatprep.subr.mxu0 0.0
    %540 = vmatpush1.xpose.msra.mxu0 %v537
    %541 = vmatprep.subr.mxu0 0.0
    %542 = vmatpush1.xpose.msra.mxu0 0.0
    %543 = vmatprep.subr.mxu0 0.0
    %544 = vmatpush1.xpose.msra.mxu0 0.0
    %545 = vmatprep.subr.mxu0 0.0
    %546 = vmatpush1.xpose.msra.mxu0 0.0
    %547 = vmatprep.subr.mxu0 0.0
    %548 = vmatpush1.xpose.msra.mxu0 0.0
    %549 = vmatprep.subr.mxu0 0.0
    %550 = vmatpush1.xpose.msra.mxu0 0.0
    %551 = vmatprep.subr.mxu0 0.0
    %552 = vmatpush1.xpose.msra.mxu0 0.0
    %553 = vmatprep.subr.mxu0 0.0
    %554 = vmatpush1.xpose.msra.mxu0 0.0
    %555 = vmatprep.subr.mxu0 0.0
    %556 = vmatpush1.xpose.msra.mxu0 0.0
    %557 = vmatprep.subr.mxu0 0.0
    %558 = vmatpush1.xpose.msra.mxu0 0.0
    %559 = vmatprep.subr.mxu0 0.0
    %560 = vmatpush1.xpose.msra.mxu0 0.0
    %561 = vmatprep.subr.mxu0 0.0
    %562 = vmatpush1.xpose.msra.mxu0 0.0
    %563 = vmatprep.subr.mxu0 0.0
    %564 = vmatpush1.xpose.msra.mxu0 0.0
    %565 = vmatprep.subr.mxu0 0.0
    %566 = vmatpush1.xpose.msra.mxu0 0.0
    %567 = vmatprep.subr.mxu0 0.0
    %568 = vmatpush1.xpose.msra.mxu0 0.0
    %569 = vmatprep.subr.mxu0 0.0
    %570 = vmatpush1.xpose.msra.mxu0 0.0
    %571 = vmatprep.subr.mxu0 0.0
    %572 = vmatpush1.xpose.msra.mxu0 0.0
    %573 = vmatprep.subr.mxu0 0.0
    %574 = vmatpush1.xpose.msra.mxu0 0.0
    %575 = vmatprep.subr.mxu0 0.0
    %576 = vmatpush1.xpose.msra.mxu0 0.0
    %577 = vmatprep.subr.mxu0 0.0
    %578 = vmatpush1.xpose.msra.mxu0 0.0
    %579 = vmatprep.subr.mxu0 0.0
    %580 = vmatpush1.xpose.msra.mxu0 0.0
    %581 = vmatprep.subr.mxu0 0.0
    %582 = vmatpush1.xpose.msra.mxu0 0.0
    %583 = vmatprep.subr.mxu0 0.0
    %584 = vmatpush1.xpose.msra.mxu0 0.0
    %585 = vmatprep.subr.mxu0 0.0
    %586 = vmatpush1.xpose.msra.mxu0 0.0
    %587 = vmatprep.subr.mxu0 0.0
    %588 = vmatpush1.xpose.msra.mxu0 0.0
    %589 = vmatprep.subr.mxu0 0.0
    %590 = vmatpush1.xpose.msra.mxu0 0.0
    %591 = vmatprep.subr.mxu0 0.0
    %592 = vmatpush1.xpose.msra.mxu0 0.0
    %593 = vmatprep.subr.mxu0 0.0
    %594 = vmatpush1.xpose.msra.mxu0 0.0
    %595 = vmatprep.subr.mxu0 0.0
    %596 = vmatpush1.xpose.msra.mxu0 0.0
    %597 = vmatprep.subr.mxu0 0.0
    %598 = vmatpush1.xpose.msra.mxu0 0.0
    %599 = vmatprep.subr.mxu0 0.0
    %600 = vmatpush1.xpose.msra.mxu0 0.0
    %601 = vmatprep.subr.mxu0 0.0
    %602 = vmatpush1.xpose.msra.mxu0 0.0
    %603 = vmatprep.mubr.f32.mxu0 0.0
    %604 = vmatmul.mubr.f32.gmra.mrb[0].mxu0 %v534
    %v605 = vpop.f32.mrb[0].mxu0
    %v606 = vadd.f32 0.0, %v605
    %v607 = vpop.f32.mrb[0].mxu0
    %608 = vdwg.mxu0
    %v609 = vlaneseq
    %v610 = vshrl.u32 %v609, 7
    %v611 = vsub.s32 0, %v610
    %v612 = vrot.slane %v198, %v611
    %613 = vrot.lane.b32.xlu0 %v612, 120
    %v614 = vpop.permute.xlu0 %613
    %v615 = vsel %vm201, %v614, 0
    %v618 = vsel %vm201, %v527, 0
    %620 = vmatprep.subr.mxu0 0.0
    %621 = vmatpush1.xpose.msra.mxu0 %v618
    %622 = vmatprep.subr.mxu0 0.0
    %623 = vmatpush1.xpose.msra.mxu0 0.0
    %624 = vmatprep.subr.mxu0 0.0
    %625 = vmatpush1.xpose.msra.mxu0 0.0
    %626 = vmatprep.subr.mxu0 0.0
    %627 = vmatpush1.xpose.msra.mxu0 0.0
    %628 = vmatprep.subr.mxu0 0.0
    %629 = vmatpush1.xpose.msra.mxu0 0.0
    %630 = vmatprep.subr.mxu0 0.0
    %631 = vmatpush1.xpose.msra.mxu0 0.0
    %632 = vmatprep.subr.mxu0 0.0
    %633 = vmatpush1.xpose.msra.mxu0 0.0
    %634 = vmatprep.subr.mxu0 0.0
    %635 = vmatpush1.xpose.msra.mxu0 0.0
    %636 = vmatprep.subr.mxu0 0.0
    %637 = vmatpush1.xpose.msra.mxu0 0.0
    %638 = vmatprep.subr.mxu0 0.0
    %639 = vmatpush1.xpose.msra.mxu0 0.0
    %640 = vmatprep.subr.mxu0 0.0
    %641 = vmatpush1.xpose.msra.mxu0 0.0
    %642 = vmatprep.subr.mxu0 0.0
    %643 = vmatpush1.xpose.msra.mxu0 0.0
    %644 = vmatprep.subr.mxu0 0.0
    %645 = vmatpush1.xpose.msra.mxu0 0.0
    %646 = vmatprep.subr.mxu0 0.0
    %647 = vmatpush1.xpose.msra.mxu0 0.0
    %648 = vmatprep.subr.mxu0 0.0
    %649 = vmatpush1.xpose.msra.mxu0 0.0
    %650 = vmatprep.subr.mxu0 0.0
    %651 = vmatpush1.xpose.msra.mxu0 0.0
    %652 = vmatprep.subr.mxu0 0.0
    %653 = vmatpush1.xpose.msra.mxu0 0.0
    %654 = vmatprep.subr.mxu0 0.0
    %655 = vmatpush1.xpose.msra.mxu0 0.0
    %656 = vmatprep.subr.mxu0 0.0
    %657 = vmatpush1.xpose.msra.mxu0 0.0
    %658 = vmatprep.subr.mxu0 0.0
    %659 = vmatpush1.xpose.msra.mxu0 0.0
    %660 = vmatprep.subr.mxu0 0.0
    %661 = vmatpush1.xpose.msra.mxu0 0.0
    %662 = vmatprep.subr.mxu0 0.0
    %663 = vmatpush1.xpose.msra.mxu0 0.0
    %664 = vmatprep.subr.mxu0 0.0
    %665 = vmatpush1.xpose.msra.mxu0 0.0
    %666 = vmatprep.subr.mxu0 0.0
    %667 = vmatpush1.xpose.msra.mxu0 0.0
    %668 = vmatprep.subr.mxu0 0.0
    %669 = vmatpush1.xpose.msra.mxu0 0.0
    %670 = vmatprep.subr.mxu0 0.0
    %671 = vmatpush1.xpose.msra.mxu0 0.0
    %672 = vmatprep.subr.mxu0 0.0
    %673 = vmatpush1.xpose.msra.mxu0 0.0
    %674 = vmatprep.subr.mxu0 0.0
    %675 = vmatpush1.xpose.msra.mxu0 0.0
    %676 = vmatprep.subr.mxu0 0.0
    %677 = vmatpush1.xpose.msra.mxu0 0.0
    %678 = vmatprep.subr.mxu0 0.0
    %679 = vmatpush1.xpose.msra.mxu0 0.0
    %680 = vmatprep.subr.mxu0 0.0
    %681 = vmatpush1.xpose.msra.mxu0 0.0
    %682 = vmatprep.subr.mxu0 0.0
    %683 = vmatpush1.xpose.msra.mxu0 0.0
    %684 = vmatprep.mubr.f32.mxu0 0.0
    %685 = vmatmul.mubr.f32.gmra.mrb[0].mxu0 %v615
    %v686 = vpop.f32.mrb[0].mxu0
    %v687 = vadd.f32 0.0, %v686
    %v688 = vpop.f32.mrb[0].mxu0
    %689 = vdwg.mxu0
    %v690 = vmul.f32 %v606, 0.35355338
    %v691 = vmul.f32 %v687, 0.35355338
    %v692 = vadd.f32 %v690, %v174
    %v693 = vadd.f32 %v691, %v175
    %v694 = vsel %vm356, %v692, -inf
    %695 = vmax.xlane.f32.xlu0 %v694
    %v696 = vpop.xlane.xlu0 %695
    %v697 = vsel %vm356, %v693, -inf
    %698 = vmax.xlane.f32.xlu0 %v697
    %v699 = vpop.xlane.xlu0 %698
    %v700 = vsub.f32 %v692, %v696
    %v701 = vsub.f32 %v693, %v699
    %v702 = vmul.f32 %v700, 1.442695
    %v703 = vpow.pop %v702
    %v704 = vmul.f32 %v701, 1.442695
    %v705 = vpow.pop %v704
    %v706 = vsel %vm356, %v703, 0.0
    %707 = vadd.xlane.f32.xlu0 %v706
    %v708 = vpop.xlane.xlu0 %707
    %v709 = vsel %vm356, %v705, 0.0
    %710 = vadd.xlane.f32.xlu0 %v709
    %v711 = vpop.xlane.xlu0 %710
    %v712 = vrcp.pop %v708
    %v713 = vrcp.pop %v711
    %v714 = vmul.f32 %v703, %v712
    %v715 = vmul.f32 %v705, %v713
    %v717 = vsel %vm201, %v714, 0
    %719 = vmatprep.subr.mxu0 0.0
    %720 = vmatpush1.msra.mxu0 %v172
    %721 = vmatprep.subr.mxu0 0.0
    %722 = vmatpush1.msra.mxu0 0.0
    %723 = vmatprep.subr.mxu0 0.0
    %724 = vmatpush1.msra.mxu0 0.0
    %725 = vmatprep.subr.mxu0 0.0
    %726 = vmatpush1.msra.mxu0 0.0
    %727 = vmatprep.subr.mxu0 0.0
    %728 = vmatpush1.msra.mxu0 0.0
    %729 = vmatprep.subr.mxu0 0.0
    %730 = vmatpush1.msra.mxu0 0.0
    %731 = vmatprep.subr.mxu0 0.0
    %732 = vmatpush1.msra.mxu0 0.0
    %733 = vmatprep.subr.mxu0 0.0
    %734 = vmatpush1.msra.mxu0 0.0
    %735 = vmatprep.subr.mxu0 0.0
    %736 = vmatpush1.msra.mxu0 0.0
    %737 = vmatprep.subr.mxu0 0.0
    %738 = vmatpush1.msra.mxu0 0.0
    %739 = vmatprep.subr.mxu0 0.0
    %740 = vmatpush1.msra.mxu0 0.0
    %741 = vmatprep.subr.mxu0 0.0
    %742 = vmatpush1.msra.mxu0 0.0
    %743 = vmatprep.subr.mxu0 0.0
    %744 = vmatpush1.msra.mxu0 0.0
    %745 = vmatprep.subr.mxu0 0.0
    %746 = vmatpush1.msra.mxu0 0.0
    %747 = vmatprep.subr.mxu0 0.0
    %748 = vmatpush1.msra.mxu0 0.0
    %749 = vmatprep.subr.mxu0 0.0
    %750 = vmatpush1.msra.mxu0 0.0
    %751 = vmatprep.subr.mxu0 0.0
    %752 = vmatpush1.msra.mxu0 0.0
    %753 = vmatprep.subr.mxu0 0.0
    %754 = vmatpush1.msra.mxu0 0.0
    %755 = vmatprep.subr.mxu0 0.0
    %756 = vmatpush1.msra.mxu0 0.0
    %757 = vmatprep.subr.mxu0 0.0
    %758 = vmatpush1.msra.mxu0 0.0
    %759 = vmatprep.subr.mxu0 0.0
    %760 = vmatpush1.msra.mxu0 0.0
    %761 = vmatprep.subr.mxu0 0.0
    %762 = vmatpush1.msra.mxu0 0.0
    %763 = vmatprep.subr.mxu0 0.0
    %764 = vmatpush1.msra.mxu0 0.0
    %765 = vmatprep.subr.mxu0 0.0
    %766 = vmatpush1.msra.mxu0 0.0
    %767 = vmatprep.subr.mxu0 0.0
    %768 = vmatpush1.msra.mxu0 0.0
    %769 = vmatprep.subr.mxu0 0.0
    %770 = vmatpush1.msra.mxu0 0.0
    %771 = vmatprep.subr.mxu0 0.0
    %772 = vmatpush1.msra.mxu0 0.0
    %773 = vmatprep.subr.mxu0 0.0
    %774 = vmatpush1.msra.mxu0 0.0
    %775 = vmatprep.subr.mxu0 0.0
    %776 = vmatpush1.msra.mxu0 0.0
    %777 = vmatprep.subr.mxu0 0.0
    %778 = vmatpush1.msra.mxu0 0.0
    %779 = vmatprep.subr.mxu0 0.0
    %780 = vmatpush1.msra.mxu0 0.0
    %781 = vmatprep.subr.mxu0 0.0
    %782 = vmatpush1.msra.mxu0 0.0
    %783 = vmatprep.mubr.f32.mxu0 0.0
    %784 = vmatmul.mubr.f32.gmra.mrb[0].mxu0 %v717
    %v785 = vpop.f32.mrb[0].mxu0
    %v786 = vadd.f32 0.0, %v785
    %v787 = vpop.f32.mrb[0].mxu0
    %788 = vdwg.mxu0
    %v790 = vsel %vm201, %v715, 0
    %792 = vmatprep.subr.mxu0 0.0
    %793 = vmatpush1.msra.mxu0 %v173
    %794 = vmatprep.subr.mxu0 0.0
    %795 = vmatpush1.msra.mxu0 0.0
    %796 = vmatprep.subr.mxu0 0.0
    %797 = vmatpush1.msra.mxu0 0.0
    %798 = vmatprep.subr.mxu0 0.0
    %799 = vmatpush1.msra.mxu0 0.0
    %800 = vmatprep.subr.mxu0 0.0
    %801 = vmatpush1.msra.mxu0 0.0
    %802 = vmatprep.subr.mxu0 0.0
    %803 = vmatpush1.msra.mxu0 0.0
    %804 = vmatprep.subr.mxu0 0.0
    %805 = vmatpush1.msra.mxu0 0.0
    %806 = vmatprep.subr.mxu0 0.0
    %807 = vmatpush1.msra.mxu0 0.0
    %808 = vmatprep.subr.mxu0 0.0
    %809 = vmatpush1.msra.mxu0 0.0
    %810 = vmatprep.subr.mxu0 0.0
    %811 = vmatpush1.msra.mxu0 0.0
    %812 = vmatprep.subr.mxu0 0.0
    %813 = vmatpush1.msra.mxu0 0.0
    %814 = vmatprep.subr.mxu0 0.0
    %815 = vmatpush1.msra.mxu0 0.0
    %816 = vmatprep.subr.mxu0 0.0
    %817 = vmatpush1.msra.mxu0 0.0
    %818 = vmatprep.subr.mxu0 0.0
    %819 = vmatpush1.msra.mxu0 0.0
    %820 = vmatprep.subr.mxu0 0.0
    %821 = vmatpush1.msra.mxu0 0.0
    %822 = vmatprep.subr.mxu0 0.0
    %823 = vmatpush1.msra.mxu0 0.0
    %824 = vmatprep.subr.mxu0 0.0
    %825 = vmatpush1.msra.mxu0 0.0
    %826 = vmatprep.subr.mxu0 0.0
    %827 = vmatpush1.msra.mxu0 0.0
    %828 = vmatprep.subr.mxu0 0.0
    %829 = vmatpush1.msra.mxu0 0.0
    %830 = vmatprep.subr.mxu0 0.0
    %831 = vmatpush1.msra.mxu0 0.0
    %832 = vmatprep.subr.mxu0 0.0
    %833 = vmatpush1.msra.mxu0 0.0
    %834 = vmatprep.subr.mxu0 0.0
    %835 = vmatpush1.msra.mxu0 0.0
    %836 = vmatprep.subr.mxu0 0.0
    %837 = vmatpush1.msra.mxu0 0.0
    %838 = vmatprep.subr.mxu0 0.0
    %839 = vmatpush1.msra.mxu0 0.0
    %840 = vmatprep.subr.mxu0 0.0
    %841 = vmatpush1.msra.mxu0 0.0
    %842 = vmatprep.subr.mxu0 0.0
    %843 = vmatpush1.msra.mxu0 0.0
    %844 = vmatprep.subr.mxu0 0.0
    %845 = vmatpush1.msra.mxu0 0.0
    %846 = vmatprep.subr.mxu0 0.0
    %847 = vmatpush1.msra.mxu0 0.0
    %848 = vmatprep.subr.mxu0 0.0
    %849 = vmatpush1.msra.mxu0 0.0
    %850 = vmatprep.subr.mxu0 0.0
    %851 = vmatpush1.msra.mxu0 0.0
    %852 = vmatprep.subr.mxu0 0.0
    %853 = vmatpush1.msra.mxu0 0.0
    %854 = vmatprep.subr.mxu0 0.0
    %855 = vmatpush1.msra.mxu0 0.0
    %856 = vmatprep.mubr.f32.mxu0 0.0
    %857 = vmatmul.mubr.f32.gmra.mrb[0].mxu0 %v790
    %v858 = vpop.f32.mrb[0].mxu0
    %v859 = vadd.f32 0.0, %v858
    %v860 = vpop.f32.mrb[0].mxu0
    %861 = vdwg.mxu0
    %s862 = scalar_lea.vmem [#allocation7], 32
    %v863 = vld [vmem:[%s862] sm:$0xff]
    %v864 = vld [vmem:[%s862 + $0x8] sm:$0xff]
    %865 = vrot.lane.b32.xlu0 %v531, 112
    %v866 = vpop.permute.xlu0 %865
    %v867 = vsel %vm201, %v866, 0
    %v870 = vsel %vm201, %v863, 0
    %872 = vmatprep.subr.mxu0 0.0
    %873 = vmatpush1.xpose.msra.mxu0 %v870
    %874 = vmatprep.subr.mxu0 0.0
    %875 = vmatpush1.xpose.msra.mxu0 0.0
    %876 = vmatprep.subr.mxu0 0.0
    %877 = vmatpush1.xpose.msra.mxu0 0.0
    %878 = vmatprep.subr.mxu0 0.0
    %879 = vmatpush1.xpose.msra.mxu0 0.0
    %880 = vmatprep.subr.mxu0 0.0
    %881 = vmatpush1.xpose.msra.mxu0 0.0
    %882 = vmatprep.subr.mxu0 0.0
    %883 = vmatpush1.xpose.msra.mxu0 0.0
    %884 = vmatprep.subr.mxu0 0.0
    %885 = vmatpush1.xpose.msra.mxu0 0.0
    %886 = vmatprep.subr.mxu0 0.0
    %887 = vmatpush1.xpose.msra.mxu0 0.0
    %888 = vmatprep.subr.mxu0 0.0
    %889 = vmatpush1.xpose.msra.mxu0 0.0
    %890 = vmatprep.subr.mxu0 0.0
    %891 = vmatpush1.xpose.msra.mxu0 0.0
    %892 = vmatprep.subr.mxu0 0.0
    %893 = vmatpush1.xpose.msra.mxu0 0.0
    %894 = vmatprep.subr.mxu0 0.0
    %895 = vmatpush1.xpose.msra.mxu0 0.0
    %896 = vmatprep.subr.mxu0 0.0
    %897 = vmatpush1.xpose.msra.mxu0 0.0
    %898 = vmatprep.subr.mxu0 0.0
    %899 = vmatpush1.xpose.msra.mxu0 0.0
    %900 = vmatprep.subr.mxu0 0.0
    %901 = vmatpush1.xpose.msra.mxu0 0.0
    %902 = vmatprep.subr.mxu0 0.0
    %903 = vmatpush1.xpose.msra.mxu0 0.0
    %904 = vmatprep.subr.mxu0 0.0
    %905 = vmatpush1.xpose.msra.mxu0 0.0
    %906 = vmatprep.subr.mxu0 0.0
    %907 = vmatpush1.xpose.msra.mxu0 0.0
    %908 = vmatprep.subr.mxu0 0.0
    %909 = vmatpush1.xpose.msra.mxu0 0.0
    %910 = vmatprep.subr.mxu0 0.0
    %911 = vmatpush1.xpose.msra.mxu0 0.0
    %912 = vmatprep.subr.mxu0 0.0
    %913 = vmatpush1.xpose.msra.mxu0 0.0
    %914 = vmatprep.subr.mxu0 0.0
    %915 = vmatpush1.xpose.msra.mxu0 0.0
    %916 = vmatprep.subr.mxu0 0.0
    %917 = vmatpush1.xpose.msra.mxu0 0.0
    %918 = vmatprep.subr.mxu0 0.0
    %919 = vmatpush1.xpose.msra.mxu0 0.0
    %920 = vmatprep.subr.mxu0 0.0
    %921 = vmatpush1.xpose.msra.mxu0 0.0
    %922 = vmatprep.subr.mxu0 0.0
    %923 = vmatpush1.xpose.msra.mxu0 0.0
    %924 = vmatprep.subr.mxu0 0.0
    %925 = vmatpush1.xpose.msra.mxu0 0.0
    %926 = vmatprep.subr.mxu0 0.0
    %927 = vmatpush1.xpose.msra.mxu0 0.0
    %928 = vmatprep.subr.mxu0 0.0
    %929 = vmatpush1.xpose.msra.mxu0 0.0
    %930 = vmatprep.subr.mxu0 0.0
    %931 = vmatpush1.xpose.msra.mxu0 0.0
    %932 = vmatprep.subr.mxu0 0.0
    %933 = vmatpush1.xpose.msra.mxu0 0.0
    %934 = vmatprep.subr.mxu0 0.0
    %935 = vmatpush1.xpose.msra.mxu0 0.0
    %936 = vmatprep.mubr.f32.mxu0 0.0
    %937 = vmatmul.mubr.f32.gmra.mrb[0].mxu0 %v867
    %v938 = vpop.f32.mrb[0].mxu0
    %v939 = vadd.f32 0.0, %v938
    %v940 = vpop.f32.mrb[0].mxu0
    %941 = vdwg.mxu0
    %942 = vrot.lane.b32.xlu0 %v612, 112
    %v943 = vpop.permute.xlu0 %942
    %v944 = vsel %vm201, %v943, 0
    %v947 = vsel %vm201, %v864, 0
    %949 = vmatprep.subr.mxu0 0.0
    %950 = vmatpush1.xpose.msra.mxu0 %v947
    %951 = vmatprep.subr.mxu0 0.0
    %952 = vmatpush1.xpose.msra.mxu0 0.0
    %953 = vmatprep.subr.mxu0 0.0
    %954 = vmatpush1.xpose.msra.mxu0 0.0
    %955 = vmatprep.subr.mxu0 0.0
    %956 = vmatpush1.xpose.msra.mxu0 0.0
    %957 = vmatprep.subr.mxu0 0.0
    %958 = vmatpush1.xpose.msra.mxu0 0.0
    %959 = vmatprep.subr.mxu0 0.0
    %960 = vmatpush1.xpose.msra.mxu0 0.0
    %961 = vmatprep.subr.mxu0 0.0
    %962 = vmatpush1.xpose.msra.mxu0 0.0
    %963 = vmatprep.subr.mxu0 0.0
    %964 = vmatpush1.xpose.msra.mxu0 0.0
    %965 = vmatprep.subr.mxu0 0.0
    %966 = vmatpush1.xpose.msra.mxu0 0.0
    %967 = vmatprep.subr.mxu0 0.0
    %968 = vmatpush1.xpose.msra.mxu0 0.0
    %969 = vmatprep.subr.mxu0 0.0
    %970 = vmatpush1.xpose.msra.mxu0 0.0
    %971 = vmatprep.subr.mxu0 0.0
    %972 = vmatpush1.xpose.msra.mxu0 0.0
    %973 = vmatprep.subr.mxu0 0.0
    %974 = vmatpush1.xpose.msra.mxu0 0.0
    %975 = vmatprep.subr.mxu0 0.0
    %976 = vmatpush1.xpose.msra.mxu0 0.0
    %977 = vmatprep.subr.mxu0 0.0
    %978 = vmatpush1.xpose.msra.mxu0 0.0
    %979 = vmatprep.subr.mxu0 0.0
    %980 = vmatpush1.xpose.msra.mxu0 0.0
    %981 = vmatprep.subr.mxu0 0.0
    %982 = vmatpush1.xpose.msra.mxu0 0.0
    %983 = vmatprep.subr.mxu0 0.0
    %984 = vmatpush1.xpose.msra.mxu0 0.0
    %985 = vmatprep.subr.mxu0 0.0
    %986 = vmatpush1.xpose.msra.mxu0 0.0
    %987 = vmatprep.subr.mxu0 0.0
    %988 = vmatpush1.xpose.msra.mxu0 0.0
    %989 = vmatprep.subr.mxu0 0.0
    %990 = vmatpush1.xpose.msra.mxu0 0.0
    %991 = vmatprep.subr.mxu0 0.0
    %992 = vmatpush1.xpose.msra.mxu0 0.0
    %993 = vmatprep.subr.mxu0 0.0
    %994 = vmatpush1.xpose.msra.mxu0 0.0
    %995 = vmatprep.subr.mxu0 0.0
    %996 = vmatpush1.xpose.msra.mxu0 0.0
    %997 = vmatprep.subr.mxu0 0.0
    %998 = vmatpush1.xpose.msra.mxu0 0.0
    %999 = vmatprep.subr.mxu0 0.0
    %1000 = vmatpush1.xpose.msra.mxu0 0.0
    %1001 = vmatprep.subr.mxu0 0.0
    %1002 = vmatpush1.xpose.msra.mxu0 0.0
    %1003 = vmatprep.subr.mxu0 0.0
    %1004 = vmatpush1.xpose.msra.mxu0 0.0
    %1005 = vmatprep.subr.mxu0 0.0
    %1006 = vmatpush1.xpose.msra.mxu0 0.0
    %1007 = vmatprep.subr.mxu0 0.0
    %1008 = vmatpush1.xpose.msra.mxu0 0.0
    %1009 = vmatprep.subr.mxu0 0.0
    %1010 = vmatpush1.xpose.msra.mxu0 0.0
    %1011 = vmatprep.subr.mxu0 0.0
    %1012 = vmatpush1.xpose.msra.mxu0 0.0
    %1013 = vmatprep.mubr.f32.mxu0 0.0
    %1014 = vmatmul.mubr.f32.gmra.mrb[0].mxu0 %v944
    %v1015 = vpop.f32.mrb[0].mxu0
    %v1016 = vadd.f32 0.0, %v1015
    %v1017 = vpop.f32.mrb[0].mxu0
    %1018 = vdwg.mxu0
    %v1019 = vmul.f32 %v939, 0.35355338
    %v1020 = vmul.f32 %v1016, 0.35355338
    %v1021 = vadd.f32 %v1019, %v174
    %v1022 = vadd.f32 %v1020, %v175
    %v1023 = vsel %vm356, %v1021, -inf
    %1024 = vmax.xlane.f32.xlu0 %v1023
    %v1025 = vpop.xlane.xlu0 %1024
    %v1026 = vsel %vm356, %v1022, -inf
    %1027 = vmax.xlane.f32.xlu0 %v1026
    %v1028 = vpop.xlane.xlu0 %1027
    %v1029 = vsub.f32 %v1021, %v1025
    %v1030 = vsub.f32 %v1022, %v1028
    %v1031 = vmul.f32 %v1029, 1.442695
    %v1032 = vpow.pop %v1031
    %v1033 = vmul.f32 %v1030, 1.442695
    %v1034 = vpow.pop %v1033
    %v1035 = vsel %vm356, %v1032, 0.0
    %1036 = vadd.xlane.f32.xlu0 %v1035
    %v1037 = vpop.xlane.xlu0 %1036
    %v1038 = vsel %vm356, %v1034, 0.0
    %1039 = vadd.xlane.f32.xlu0 %v1038
    %v1040 = vpop.xlane.xlu0 %1039
    %v1041 = vrcp.pop %v1037
    %v1042 = vrcp.pop %v1040
    %v1043 = vmul.f32 %v1032, %v1041
    %v1044 = vmul.f32 %v1034, %v1042
    %v1046 = vsel %vm201, %v1043, 0
    %1048 = vmatprep.subr.mxu0 0.0
    %1049 = vmatpush1.msra.mxu0 %v172
    %1050 = vmatprep.subr.mxu0 0.0
    %1051 = vmatpush1.msra.mxu0 0.0
    %1052 = vmatprep.subr.mxu0 0.0
    %1053 = vmatpush1.msra.mxu0 0.0
    %1054 = vmatprep.subr.mxu0 0.0
    %1055 = vmatpush1.msra.mxu0 0.0
    %1056 = vmatprep.subr.mxu0 0.0
    %1057 = vmatpush1.msra.mxu0 0.0
    %1058 = vmatprep.subr.mxu0 0.0
    %1059 = vmatpush1.msra.mxu0 0.0
    %1060 = vmatprep.subr.mxu0 0.0
    %1061 = vmatpush1.msra.mxu0 0.0
    %1062 = vmatprep.subr.mxu0 0.0
    %1063 = vmatpush1.msra.mxu0 0.0
    %1064 = vmatprep.subr.mxu0 0.0
    %1065 = vmatpush1.msra.mxu0 0.0
    %1066 = vmatprep.subr.mxu0 0.0
    %1067 = vmatpush1.msra.mxu0 0.0
    %1068 = vmatprep.subr.mxu0 0.0
    %1069 = vmatpush1.msra.mxu0 0.0
    %1070 = vmatprep.subr.mxu0 0.0
    %1071 = vmatpush1.msra.mxu0 0.0
    %1072 = vmatprep.subr.mxu0 0.0
    %1073 = vmatpush1.msra.mxu0 0.0
    %1074 = vmatprep.subr.mxu0 0.0
    %1075 = vmatpush1.msra.mxu0 0.0
    %1076 = vmatprep.subr.mxu0 0.0
    %1077 = vmatpush1.msra.mxu0 0.0
    %1078 = vmatprep.subr.mxu0 0.0
    %1079 = vmatpush1.msra.mxu0 0.0
    %1080 = vmatprep.subr.mxu0 0.0
    %1081 = vmatpush1.msra.mxu0 0.0
    %1082 = vmatprep.subr.mxu0 0.0
    %1083 = vmatpush1.msra.mxu0 0.0
    %1084 = vmatprep.subr.mxu0 0.0
    %1085 = vmatpush1.msra.mxu0 0.0
    %1086 = vmatprep.subr.mxu0 0.0
    %1087 = vmatpush1.msra.mxu0 0.0
    %1088 = vmatprep.subr.mxu0 0.0
    %1089 = vmatpush1.msra.mxu0 0.0
    %1090 = vmatprep.subr.mxu0 0.0
    %1091 = vmatpush1.msra.mxu0 0.0
    %1092 = vmatprep.subr.mxu0 0.0
    %1093 = vmatpush1.msra.mxu0 0.0
    %1094 = vmatprep.subr.mxu0 0.0
    %1095 = vmatpush1.msra.mxu0 0.0
    %1096 = vmatprep.subr.mxu0 0.0
    %1097 = vmatpush1.msra.mxu0 0.0
    %1098 = vmatprep.subr.mxu0 0.0
    %1099 = vmatpush1.msra.mxu0 0.0
    %1100 = vmatprep.subr.mxu0 0.0
    %1101 = vmatpush1.msra.mxu0 0.0
    %1102 = vmatprep.subr.mxu0 0.0
    %1103 = vmatpush1.msra.mxu0 0.0
    %1104 = vmatprep.subr.mxu0 0.0
    %1105 = vmatpush1.msra.mxu0 0.0
    %1106 = vmatprep.subr.mxu0 0.0
    %1107 = vmatpush1.msra.mxu0 0.0
    %1108 = vmatprep.subr.mxu0 0.0
    %1109 = vmatpush1.msra.mxu0 0.0
    %1110 = vmatprep.subr.mxu0 0.0
    %1111 = vmatpush1.msra.mxu0 0.0
    %1112 = vmatprep.mubr.f32.mxu0 0.0
    %1113 = vmatmul.mubr.f32.gmra.mrb[0].mxu0 %v1046
    %v1114 = vpop.f32.mrb[0].mxu0
    %v1115 = vadd.f32 0.0, %v1114
    %v1116 = vpop.f32.mrb[0].mxu0
    %1117 = vdwg.mxu0
    %v1119 = vsel %vm201, %v1044, 0
    %1121 = vmatprep.subr.mxu0 0.0
    %1122 = vmatpush1.msra.mxu0 %v173
    %1123 = vmatprep.subr.mxu0 0.0
    %1124 = vmatpush1.msra.mxu0 0.0
    %1125 = vmatprep.subr.mxu0 0.0
    %1126 = vmatpush1.msra.mxu0 0.0
    %1127 = vmatprep.subr.mxu0 0.0
    %1128 = vmatpush1.msra.mxu0 0.0
    %1129 = vmatprep.subr.mxu0 0.0
    %1130 = vmatpush1.msra.mxu0 0.0
    %1131 = vmatprep.subr.mxu0 0.0
    %1132 = vmatpush1.msra.mxu0 0.0
    %1133 = vmatprep.subr.mxu0 0.0
    %1134 = vmatpush1.msra.mxu0 0.0
    %1135 = vmatprep.subr.mxu0 0.0
    %1136 = vmatpush1.msra.mxu0 0.0
    %1137 = vmatprep.subr.mxu0 0.0
    %1138 = vmatpush1.msra.mxu0 0.0
    %1139 = vmatprep.subr.mxu0 0.0
    %1140 = vmatpush1.msra.mxu0 0.0
    %1141 = vmatprep.subr.mxu0 0.0
    %1142 = vmatpush1.msra.mxu0 0.0
    %1143 = vmatprep.subr.mxu0 0.0
    %1144 = vmatpush1.msra.mxu0 0.0
    %1145 = vmatprep.subr.mxu0 0.0
    %1146 = vmatpush1.msra.mxu0 0.0
    %1147 = vmatprep.subr.mxu0 0.0
    %1148 = vmatpush1.msra.mxu0 0.0
    %1149 = vmatprep.subr.mxu0 0.0
    %1150 = vmatpush1.msra.mxu0 0.0
    %1151 = vmatprep.subr.mxu0 0.0
    %1152 = vmatpush1.msra.mxu0 0.0
    %1153 = vmatprep.subr.mxu0 0.0
    %1154 = vmatpush1.msra.mxu0 0.0
    %1155 = vmatprep.subr.mxu0 0.0
    %1156 = vmatpush1.msra.mxu0 0.0
    %1157 = vmatprep.subr.mxu0 0.0
    %1158 = vmatpush1.msra.mxu0 0.0
    %1159 = vmatprep.subr.mxu0 0.0
    %1160 = vmatpush1.msra.mxu0 0.0
    %1161 = vmatprep.subr.mxu0 0.0
    %1162 = vmatpush1.msra.mxu0 0.0
    %1163 = vmatprep.subr.mxu0 0.0
    %1164 = vmatpush1.msra.mxu0 0.0
    %1165 = vmatprep.subr.mxu0 0.0
    %1166 = vmatpush1.msra.mxu0 0.0
    %1167 = vmatprep.subr.mxu0 0.0
    %1168 = vmatpush1.msra.mxu0 0.0
    %1169 = vmatprep.subr.mxu0 0.0
    %1170 = vmatpush1.msra.mxu0 0.0
    %1171 = vmatprep.subr.mxu0 0.0
    %1172 = vmatpush1.msra.mxu0 0.0
    %1173 = vmatprep.subr.mxu0 0.0
    %1174 = vmatpush1.msra.mxu0 0.0
    %1175 = vmatprep.subr.mxu0 0.0
    %1176 = vmatpush1.msra.mxu0 0.0
    %1177 = vmatprep.subr.mxu0 0.0
    %1178 = vmatpush1.msra.mxu0 0.0
    %1179 = vmatprep.subr.mxu0 0.0
    %1180 = vmatpush1.msra.mxu0 0.0
    %1181 = vmatprep.subr.mxu0 0.0
    %1182 = vmatpush1.msra.mxu0 0.0
    %1183 = vmatprep.subr.mxu0 0.0
    %1184 = vmatpush1.msra.mxu0 0.0
    %1185 = vmatprep.mubr.f32.mxu0 0.0
    %1186 = vmatmul.mubr.f32.gmra.mrb[0].mxu0 %v1119
    %v1187 = vpop.f32.mrb[0].mxu0
    %v1188 = vadd.f32 0.0, %v1187
    %v1189 = vpop.f32.mrb[0].mxu0
    %1190 = vdwg.mxu0
    %s1191 = scalar_lea.vmem [#allocation7], 48
    %v1192 = vld [vmem:[%s1191] sm:$0xff]
    %v1193 = vld [vmem:[%s1191 + $0x8] sm:$0xff]
    %1194 = vrot.lane.b32.xlu0 %v531, 104
    %v1195 = vpop.permute.xlu0 %1194
    %v1196 = vsel %vm201, %v1195, 0
    %v1199 = vsel %vm201, %v1192, 0
    %1201 = vmatprep.subr.mxu0 0.0
    %1202 = vmatpush1.xpose.msra.mxu0 %v1199
    %1203 = vmatprep.subr.mxu0 0.0
    %1204 = vmatpush1.xpose.msra.mxu0 0.0
    %1205 = vmatprep.subr.mxu0 0.0
    %1206 = vmatpush1.xpose.msra.mxu0 0.0
    %1207 = vmatprep.subr.mxu0 0.0
    %1208 = vmatpush1.xpose.msra.mxu0 0.0
    %1209 = vmatprep.subr.mxu0 0.0
    %1210 = vmatpush1.xpose.msra.mxu0 0.0
    %1211 = vmatprep.subr.mxu0 0.0
    %1212 = vmatpush1.xpose.msra.mxu0 0.0
    %1213 = vmatprep.subr.mxu0 0.0
    %1214 = vmatpush1.xpose.msra.mxu0 0.0
    %1215 = vmatprep.subr.mxu0 0.0
    %1216 = vmatpush1.xpose.msra.mxu0 0.0
    %1217 = vmatprep.subr.mxu0 0.0
    %1218 = vmatpush1.xpose.msra.mxu0 0.0
    %1219 = vmatprep.subr.mxu0 0.0
    %1220 = vmatpush1.xpose.msra.mxu0 0.0
    %1221 = vmatprep.subr.mxu0 0.0
    %1222 = vmatpush1.xpose.msra.mxu0 0.0
    %1223 = vmatprep.subr.mxu0 0.0
    %1224 = vmatpush1.xpose.msra.mxu0 0.0
    %1225 = vmatprep.subr.mxu0 0.0
    %1226 = vmatpush1.xpose.msra.mxu0 0.0
    %1227 = vmatprep.subr.mxu0 0.0
    %1228 = vmatpush1.xpose.msra.mxu0 0.0
    %1229 = vmatprep.subr.mxu0 0.0
    %1230 = vmatpush1.xpose.msra.mxu0 0.0
    %1231 = vmatprep.subr.mxu0 0.0
    %1232 = vmatpush1.xpose.msra.mxu0 0.0
    %1233 = vmatprep.subr.mxu0 0.0
    %1234 = vmatpush1.xpose.msra.mxu0 0.0
    %1235 = vmatprep.subr.mxu0 0.0
    %1236 = vmatpush1.xpose.msra.mxu0 0.0
    %1237 = vmatprep.subr.mxu0 0.0
    %1238 = vmatpush1.xpose.msra.mxu0 0.0
    %1239 = vmatprep.subr.mxu0 0.0
    %1240 = vmatpush1.xpose.msra.mxu0 0.0
    %1241 = vmatprep.subr.mxu0 0.0
    %1242 = vmatpush1.xpose.msra.mxu0 0.0
    %1243 = vmatprep.subr.mxu0 0.0
    %1244 = vmatpush1.xpose.msra.mxu0 0.0
    %1245 = vmatprep.subr.mxu0 0.0
    %1246 = vmatpush1.xpose.msra.mxu0 0.0
    %1247 = vmatprep.subr.mxu0 0.0
    %1248 = vmatpush1.xpose.msra.mxu0 0.0
    %1249 = vmatprep.subr.mxu0 0.0
    %1250 = vmatpush1.xpose.msra.mxu0 0.0
    %1251 = vmatprep.subr.mxu0 0.0
    %1252 = vmatpush1.xpose.msra.mxu0 0.0
    %1253 = vmatprep.subr.mxu0 0.0
    %1254 = vmatpush1.xpose.msra.mxu0 0.0
    %1255 = vmatprep.subr.mxu0 0.0
    %1256 = vmatpush1.xpose.msra.mxu0 0.0
    %1257 = vmatprep.subr.mxu0 0.0
    %1258 = vmatpush1.xpose.msra.mxu0 0.0
    %1259 = vmatprep.subr.mxu0 0.0
    %1260 = vmatpush1.xpose.msra.mxu0 0.0
    %1261 = vmatprep.subr.mxu0 0.0
    %1262 = vmatpush1.xpose.msra.mxu0 0.0
    %1263 = vmatprep.subr.mxu0 0.0
    %1264 = vmatpush1.xpose.msra.mxu0 0.0
    %1265 = vmatprep.mubr.f32.mxu0 0.0
    %1266 = vmatmul.mubr.f32.gmra.mrb[0].mxu0 %v1196
    %v1267 = vpop.f32.mrb[0].mxu0
    %v1268 = vadd.f32 0.0, %v1267
    %v1269 = vpop.f32.mrb[0].mxu0
    %1270 = vdwg.mxu0
    %1271 = vrot.lane.b32.xlu0 %v612, 104
    %v1272 = vpop.permute.xlu0 %1271
    %v1273 = vsel %vm201, %v1272, 0
    %v1276 = vsel %vm201, %v1193, 0
    %1278 = vmatprep.subr.mxu0 0.0
    %1279 = vmatpush1.xpose.msra.mxu0 %v1276
    %1280 = vmatprep.subr.mxu0 0.0
    %1281 = vmatpush1.xpose.msra.mxu0 0.0
    %1282 = vmatprep.subr.mxu0 0.0
    %1283 = vmatpush1.xpose.msra.mxu0 0.0
    %1284 = vmatprep.subr.mxu0 0.0
    %1285 = vmatpush1.xpose.msra.mxu0 0.0
    %1286 = vmatprep.subr.mxu0 0.0
    %1287 = vmatpush1.xpose.msra.mxu0 0.0
    %1288 = vmatprep.subr.mxu0 0.0
    %1289 = vmatpush1.xpose.msra.mxu0 0.0
    %1290 = vmatprep.subr.mxu0 0.0
    %1291 = vmatpush1.xpose.msra.mxu0 0.0
    %1292 = vmatprep.subr.mxu0 0.0
    %1293 = vmatpush1.xpose.msra.mxu0 0.0
    %1294 = vmatprep.subr.mxu0 0.0
    %1295 = vmatpush1.xpose.msra.mxu0 0.0
    %1296 = vmatprep.subr.mxu0 0.0
    %1297 = vmatpush1.xpose.msra.mxu0 0.0
    %1298 = vmatprep.subr.mxu0 0.0
    %1299 = vmatpush1.xpose.msra.mxu0 0.0
    %1300 = vmatprep.subr.mxu0 0.0
    %1301 = vmatpush1.xpose.msra.mxu0 0.0
    %1302 = vmatprep.subr.mxu0 0.0
    %1303 = vmatpush1.xpose.msra.mxu0 0.0
    %1304 = vmatprep.subr.mxu0 0.0
    %1305 = vmatpush1.xpose.msra.mxu0 0.0
    %1306 = vmatprep.subr.mxu0 0.0
    %1307 = vmatpush1.xpose.msra.mxu0 0.0
    %1308 = vmatprep.subr.mxu0 0.0
    %1309 = vmatpush1.xpose.msra.mxu0 0.0
    %1310 = vmatprep.subr.mxu0 0.0
    %1311 = vmatpush1.xpose.msra.mxu0 0.0
    %1312 = vmatprep.subr.mxu0 0.0
    %1313 = vmatpush1.xpose.msra.mxu0 0.0
    %1314 = vmatprep.subr.mxu0 0.0
    %1315 = vmatpush1.xpose.msra.mxu0 0.0
    %1316 = vmatprep.subr.mxu0 0.0
    %1317 = vmatpush1.xpose.msra.mxu0 0.0
    %1318 = vmatprep.subr.mxu0 0.0
    %1319 = vmatpush1.xpose.msra.mxu0 0.0
    %1320 = vmatprep.subr.mxu0 0.0
    %1321 = vmatpush1.xpose.msra.mxu0 0.0
    %1322 = vmatprep.subr.mxu0 0.0
    %1323 = vmatpush1.xpose.msra.mxu0 0.0
    %1324 = vmatprep.subr.mxu0 0.0
    %1325 = vmatpush1.xpose.msra.mxu0 0.0
    %1326 = vmatprep.subr.mxu0 0.0
    %1327 = vmatpush1.xpose.msra.mxu0 0.0
    %1328 = vmatprep.subr.mxu0 0.0
    %1329 = vmatpush1.xpose.msra.mxu0 0.0
    %1330 = vmatprep.subr.mxu0 0.0
    %1331 = vmatpush1.xpose.msra.mxu0 0.0
    %1332 = vmatprep.subr.mxu0 0.0
    %1333 = vmatpush1.xpose.msra.mxu0 0.0
    %1334 = vmatprep.subr.mxu0 0.0
    %1335 = vmatpush1.xpose.msra.mxu0 0.0
    %1336 = vmatprep.subr.mxu0 0.0
    %1337 = vmatpush1.xpose.msra.mxu0 0.0
    %1338 = vmatprep.subr.mxu0 0.0
    %1339 = vmatpush1.xpose.msra.mxu0 0.0
    %1340 = vmatprep.subr.mxu0 0.0
    %1341 = vmatpush1.xpose.msra.mxu0 0.0
    %1342 = vmatprep.mubr.f32.mxu0 0.0
    %1343 = vmatmul.mubr.f32.gmra.mrb[0].mxu0 %v1273
    %v1344 = vpop.f32.mrb[0].mxu0
    %v1345 = vadd.f32 0.0, %v1344
    %v1346 = vpop.f32.mrb[0].mxu0
    %1347 = vdwg.mxu0
    %v1348 = vmul.f32 %v1268, 0.35355338
    %v1349 = vmul.f32 %v1345, 0.35355338
    %v1350 = vadd.f32 %v1348, %v174
    %v1351 = vadd.f32 %v1349, %v175
    %v1352 = vsel %vm356, %v1350, -inf
    %1353 = vmax.xlane.f32.xlu0 %v1352
    %v1354 = vpop.xlane.xlu0 %1353
    %v1355 = vsel %vm356, %v1351, -inf
    %1356 = vmax.xlane.f32.xlu0 %v1355
    %v1357 = vpop.xlane.xlu0 %1356
    %v1358 = vsub.f32 %v1350, %v1354
    %v1359 = vsub.f32 %v1351, %v1357
    %v1360 = vmul.f32 %v1358, 1.442695
    %v1361 = vpow.pop %v1360
    %v1362 = vmul.f32 %v1359, 1.442695
    %v1363 = vpow.pop %v1362
    %v1364 = vsel %vm356, %v1361, 0.0
    %1365 = vadd.xlane.f32.xlu0 %v1364
    %v1366 = vpop.xlane.xlu0 %1365
    %v1367 = vsel %vm356, %v1363, 0.0
    %1368 = vadd.xlane.f32.xlu0 %v1367
    %v1369 = vpop.xlane.xlu0 %1368
    %v1370 = vrcp.pop %v1366
    %v1371 = vrcp.pop %v1369
    %v1372 = vmul.f32 %v1361, %v1370
    %v1373 = vmul.f32 %v1363, %v1371
    %v1375 = vsel %vm201, %v1372, 0
    %1377 = vmatprep.subr.mxu0 0.0
    %1378 = vmatpush1.msra.mxu0 %v172
    %1379 = vmatprep.subr.mxu0 0.0
    %1380 = vmatpush1.msra.mxu0 0.0
    %1381 = vmatprep.subr.mxu0 0.0
    %1382 = vmatpush1.msra.mxu0 0.0
    %1383 = vmatprep.subr.mxu0 0.0
    %1384 = vmatpush1.msra.mxu0 0.0
    %1385 = vmatprep.subr.mxu0 0.0
    %1386 = vmatpush1.msra.mxu0 0.0
    %1387 = vmatprep.subr.mxu0 0.0
    %1388 = vmatpush1.msra.mxu0 0.0
    %1389 = vmatprep.subr.mxu0 0.0
    %1390 = vmatpush1.msra.mxu0 0.0
    %1391 = vmatprep.subr.mxu0 0.0
    %1392 = vmatpush1.msra.mxu0 0.0
    %1393 = vmatprep.subr.mxu0 0.0
    %1394 = vmatpush1.msra.mxu0 0.0
    %1395 = vmatprep.subr.mxu0 0.0
    %1396 = vmatpush1.msra.mxu0 0.0
    %1397 = vmatprep.subr.mxu0 0.0
    %1398 = vmatpush1.msra.mxu0 0.0
    %1399 = vmatprep.subr.mxu0 0.0
    %1400 = vmatpush1.msra.mxu0 0.0
    %1401 = vmatprep.subr.mxu0 0.0
    %1402 = vmatpush1.msra.mxu0 0.0
    %1403 = vmatprep.subr.mxu0 0.0
    %1404 = vmatpush1.msra.mxu0 0.0
    %1405 = vmatprep.subr.mxu0 0.0
    %1406 = vmatpush1.msra.mxu0 0.0
    %1407 = vmatprep.subr.mxu0 0.0
    %1408 = vmatpush1.msra.mxu0 0.0
    %1409 = vmatprep.subr.mxu0 0.0
    %1410 = vmatpush1.msra.mxu0 0.0
    %1411 = vmatprep.subr.mxu0 0.0
    %1412 = vmatpush1.msra.mxu0 0.0
    %1413 = vmatprep.subr.mxu0 0.0
    %1414 = vmatpush1.msra.mxu0 0.0
    %1415 = vmatprep.subr.mxu0 0.0
    %1416 = vmatpush1.msra.mxu0 0.0
    %1417 = vmatprep.subr.mxu0 0.0
    %1418 = vmatpush1.msra.mxu0 0.0
    %1419 = vmatprep.subr.mxu0 0.0
    %1420 = vmatpush1.msra.mxu0 0.0
    %1421 = vmatprep.subr.mxu0 0.0
    %1422 = vmatpush1.msra.mxu0 0.0
    %1423 = vmatprep.subr.mxu0 0.0
    %1424 = vmatpush1.msra.mxu0 0.0
    %1425 = vmatprep.subr.mxu0 0.0
    %1426 = vmatpush1.msra.mxu0 0.0
    %1427 = vmatprep.subr.mxu0 0.0
    %1428 = vmatpush1.msra.mxu0 0.0
    %1429 = vmatprep.subr.mxu0 0.0
    %1430 = vmatpush1.msra.mxu0 0.0
    %1431 = vmatprep.subr.mxu0 0.0
    %1432 = vmatpush1.msra.mxu0 0.0
    %1433 = vmatprep.subr.mxu0 0.0
    %1434 = vmatpush1.msra.mxu0 0.0
    %1435 = vmatprep.subr.mxu0 0.0
    %1436 = vmatpush1.msra.mxu0 0.0
    %1437 = vmatprep.subr.mxu0 0.0
    %1438 = vmatpush1.msra.mxu0 0.0
    %1439 = vmatprep.subr.mxu0 0.0
    %1440 = vmatpush1.msra.mxu0 0.0
    %1441 = vmatprep.mubr.f32.mxu0 0.0
    %1442 = vmatmul.mubr.f32.gmra.mrb[0].mxu0 %v1375
    %v1443 = vpop.f32.mrb[0].mxu0
    %v1444 = vadd.f32 0.0, %v1443
    %v1445 = vpop.f32.mrb[0].mxu0
    %1446 = vdwg.mxu0
    %v1448 = vsel %vm201, %v1373, 0
    %1450 = vmatprep.subr.mxu0 0.0
    %1451 = vmatpush1.msra.mxu0 %v173
    %1452 = vmatprep.subr.mxu0 0.0
    %1453 = vmatpush1.msra.mxu0 0.0
    %1454 = vmatprep.subr.mxu0 0.0
    %1455 = vmatpush1.msra.mxu0 0.0
    %1456 = vmatprep.subr.mxu0 0.0
    %1457 = vmatpush1.msra.mxu0 0.0
    %1458 = vmatprep.subr.mxu0 0.0
    %1459 = vmatpush1.msra.mxu0 0.0
    %1460 = vmatprep.subr.mxu0 0.0
    %1461 = vmatpush1.msra.mxu0 0.0
    %1462 = vmatprep.subr.mxu0 0.0
    %1463 = vmatpush1.msra.mxu0 0.0
    %1464 = vmatprep.subr.mxu0 0.0
    %1465 = vmatpush1.msra.mxu0 0.0
    %1466 = vmatprep.subr.mxu0 0.0
    %1467 = vmatpush1.msra.mxu0 0.0
    %1468 = vmatprep.subr.mxu0 0.0
    %1469 = vmatpush1.msra.mxu0 0.0
    %1470 = vmatprep.subr.mxu0 0.0
    %1471 = vmatpush1.msra.mxu0 0.0
    %1472 = vmatprep.subr.mxu0 0.0
    %1473 = vmatpush1.msra.mxu0 0.0
    %1474 = vmatprep.subr.mxu0 0.0
    %1475 = vmatpush1.msra.mxu0 0.0
    %1476 = vmatprep.subr.mxu0 0.0
    %1477 = vmatpush1.msra.mxu0 0.0
    %1478 = vmatprep.subr.mxu0 0.0
    %1479 = vmatpush1.msra.mxu0 0.0
    %1480 = vmatprep.subr.mxu0 0.0
    %1481 = vmatpush1.msra.mxu0 0.0
    %1482 = vmatprep.subr.mxu0 0.0
    %1483 = vmatpush1.msra.mxu0 0.0
    %1484 = vmatprep.subr.mxu0 0.0
    %1485 = vmatpush1.msra.mxu0 0.0
    %1486 = vmatprep.subr.mxu0 0.0
    %1487 = vmatpush1.msra.mxu0 0.0
    %1488 = vmatprep.subr.mxu0 0.0
    %1489 = vmatpush1.msra.mxu0 0.0
    %1490 = vmatprep.subr.mxu0 0.0
    %1491 = vmatpush1.msra.mxu0 0.0
    %1492 = vmatprep.subr.mxu0 0.0
    %1493 = vmatpush1.msra.mxu0 0.0
    %1494 = vmatprep.subr.mxu0 0.0
    %1495 = vmatpush1.msra.mxu0 0.0
    %1496 = vmatprep.subr.mxu0 0.0
    %1497 = vmatpush1.msra.mxu0 0.0
    %1498 = vmatprep.subr.mxu0 0.0
    %1499 = vmatpush1.msra.mxu0 0.0
    %1500 = vmatprep.subr.mxu0 0.0
    %1501 = vmatpush1.msra.mxu0 0.0
    %1502 = vmatprep.subr.mxu0 0.0
    %1503 = vmatpush1.msra.mxu0 0.0
    %1504 = vmatprep.subr.mxu0 0.0
    %1505 = vmatpush1.msra.mxu0 0.0
    %1506 = vmatprep.subr.mxu0 0.0
    %1507 = vmatpush1.msra.mxu0 0.0
    %1508 = vmatprep.subr.mxu0 0.0
    %1509 = vmatpush1.msra.mxu0 0.0
    %1510 = vmatprep.subr.mxu0 0.0
    %1511 = vmatpush1.msra.mxu0 0.0
    %1512 = vmatprep.subr.mxu0 0.0
    %1513 = vmatpush1.msra.mxu0 0.0
    %1514 = vmatprep.mubr.f32.mxu0 0.0
    %1515 = vmatmul.mubr.f32.gmra.mrb[0].mxu0 %v1448
    %v1516 = vpop.f32.mrb[0].mxu0
    %v1517 = vadd.f32 0.0, %v1516
    %v1518 = vpop.f32.mrb[0].mxu0
    %1519 = vdwg.mxu0
    %1522 = vrot.lane.b32.xlu0 %v786, 8
    %v1523 = vpop.permute.xlu0 %1522
    %1524 = vrot.lane.b32.xlu0 %v859, 8
    %v1525 = vpop.permute.xlu0 %1524
    %1530 = vrot.lane.b32.xlu0 %v1115, 16
    %v1531 = vpop.permute.xlu0 %1530
    %1532 = vrot.lane.b32.xlu0 %v1188, 16
    %v1533 = vpop.permute.xlu0 %1532
    %1538 = vrot.lane.b32.xlu0 %v1444, 24
    %v1539 = vpop.permute.xlu0 %1538
    %1540 = vrot.lane.b32.xlu0 %v1517, 24
    %v1541 = vpop.permute.xlu0 %1540
    %v1544 = vsel %vm201, %v449, %v1523
    %v1545 = vsel %vm201, %v522, %v1525
    %vm1546 = vcmask 130048
    %v1547 = vsel %vm1546, %v1544, %v1531
    %v1548 = vsel %vm1546, %v1545, %v1533
    %vm1549 = vcmask 195584
    %v1550 = vsel %vm1549, %v1547, %v1539
    %v1551 = vsel %vm1549, %v1548, %v1541
    %vm1552 = vcmask 253952
    %1553 = vst.msk [vmem:[#allocation10] sm:$0x1] %vm1552, %v1550
    %1554 = vst.msk [vmem:[#allocation10 + $0x1] sm:$0x1] %vm1552, %v1551
    // Predicated region
    $region38: #{tpu_custom_call.1} parent=1 // pred_check
      _
    $region39: #{tpu_custom_call.1} parent=1 // pred_check_branch
      %1556 = sbr.rel (0) target = $region41
    $region40: #{tpu_custom_call.1} parent=1 // pred_region
      %s1558 = ssub.s32 32, 32
      %1559 = vsyncadd [#allocation4], %s1558
      %s1560 = sshll.u32 [#allocation10], 4
      %s1561 = int_to_ptr.vmem [resolvable:$true] %s1560
      %1566 = dma.vmem_to_hbm [thread:$0]  %s1561, 32, %s5, [#allocation4], 16, 16, 1
    $region41: #{tpu_custom_call.1} parent=1 // pred_fallthru
      _
    // Predicated region
    $region42: #{tpu_custom_call.1} parent=1 // pred_check
      _
    $region43: #{tpu_custom_call.1} parent=1 // pred_check_branch
      %1568 = sbr.rel (0) target = $region45
    $region44: #{tpu_custom_call.1} parent=1 // pred_region
      %1569 = dma.done [#allocation4], 32
    $region45: #{tpu_custom_call.1} parent=1 // pred_fallthru
      _
    %1570 = vsyncpa [#allocation3], 1
    %1571 = vsyncpa [#allocation6], 1
    %1572 = vsyncpa [#allocation9], 1
    %1573 = vsyncpa [#allocation4], 1

</llo_original>
